<compile_context>
chip_gen: v7x
topology: tpu7x:2x2x1
jax: 0.10.0
libtpu: 0.0.40
codegen_flags: <defaults>
</compile_context>

<pallas_src>
import functools

import jax
import jax.numpy as jnp
from jax import lax
from jax.experimental import pallas as pl
from jax.experimental.pallas import tpu as pltpu


# ---------------------------------------------------------------------------
# Fused Pallas kernel
# ---------------------------------------------------------------------------

def _round_up(x, m):
    return ((x + m - 1) // m) * m


def _win(ref, start, size, stride):
    """Contiguous (stride==1) or sublane-strided window load from a VMEM ref."""
    if stride == 1:
        return ref[pl.ds(start, size), :]
    return ref[pl.ds(start, size, stride), :]


def _fused_residual_kernel(*refs, k, s, pad, tl, tls, hw, l1, use_res):
    if use_res:
        (x_ref, xh_ref, w1_ref, w2_ref, ws_ref, sh1_ref, sh2_ref,
         o_ref, xw_ref, h1_ref) = refs
    else:
        (x_ref, xh_ref, w1_ref, w2_ref, sh1_ref, sh2_ref,
         o_ref, xw_ref, h1_ref) = refs
        ws_ref = None

    t0 = pl.program_id(1) * tl  # first output position of this tile

    # Assemble the input window (main tile + right halo) once in VMEM; all conv
    # windows below are formed in-VMEM from this buffer (no host-side im2col).
    xw_ref[:tls, :] = x_ref[...]
    xw_ref[tls:, :] = xh_ref[...]

    # ---- conv1 (stride s) + BN1 (scale folded into w1) + tanh -----------------
    # Computed for tl + 2*pad halo rows so conv2 needs no extra HBM traffic.
    acc = jnp.dot(_win(xw_ref, 0, hw, s), w1_ref[0],
                  preferred_element_type=jnp.float32)
    for j in range(1, k):
        acc = acc + jnp.dot(_win(xw_ref, j, hw, s), w1_ref[j],
                            preferred_element_type=jnp.float32)
    h1 = jnp.tanh(acc + sh1_ref[...])

    # Zero halo rows outside the valid conv1 output range [0, l1): this realizes
    # conv2's zero padding at the sequence edges.
    r = lax.broadcasted_iota(jnp.int32, (hw, 1), 0)
    p_abs = r + (t0 - pad)
    h1 = jnp.where(jnp.logical_and(p_abs >= 0, p_abs < l1), h1, 0.0)
    h1_ref[...] = h1

    # ---- conv2 (stride 1) + BN2  (+ 1x1 stride-s shortcut + BNs) + tanh -------
    acc2 = jnp.dot(h1_ref[pl.ds(0, tl), :], w2_ref[0],
                   preferred_element_type=jnp.float32)
    for j in range(1, k):
        acc2 = acc2 + jnp.dot(h1_ref[pl.ds(j, tl), :], w2_ref[j],
                              preferred_element_type=jnp.float32)
    if use_res:
        xs = _win(xw_ref, pad * s + pad, tl, s)  # x[t*s] for the 1x1 stride-s conv
        acc2 = acc2 + jnp.dot(xs, ws_ref[...], preferred_element_type=jnp.float32)

    o_ref[...] = jnp.tanh(acc2 + sh2_ref[...])


# ---------------------------------------------------------------------------
# Wrapper: layout plumbing + BN folding + pallas_call
# ---------------------------------------------------------------------------

def fold_bn(p, eps=1e-5):
    scale = p["gamma"] / jnp.sqrt(p["var"] + eps)
    shift = p["beta"] - p["mean"] * scale
    return scale, shift


def residual_block_forward(x_ncl, params, kernel_size, stride, use_res,
                           tile_l=512):
    """Equivalent of ResidualBlock.forward (eval mode). Input/output are NCL."""
    n, c_in, l = x_ncl.shape
    k, s = kernel_size, stride
    pad = k // 2
    c_out = params["w1"].shape[0]
    l1 = (l + 2 * pad - k) // s + 1          # conv1 / final output length

    cip = _round_up(c_in, 128)               # lane-dense input channels
    cop = _round_up(c_out, 128)              # lane-dense output channels
    tl = min(_round_up(l1, 8), _round_up(tile_l, 8))   # output rows per grid step
    nt = pl.cdiv(l1, tl)
    tls = tl * s
    hw = _round_up(tl + 2 * pad, 8)          # conv1 rows per step (tile + halo)
    xw_rows = (hw - 1) * s + k               # input rows needed per step
    h = _round_up(max(xw_rows - tls, 8), 8)  # right-halo rows (fetched separately)

    # --- host-side layout plumbing (cheap, 1x data): NCL -> NLC, zero-pad L & channels
    left = pad * s + pad
    total_l = nt * tls + h
    right = max(total_l - left - l, 0)
    x_p = jnp.pad(jnp.transpose(x_ncl, (0, 2, 1)).astype(jnp.float32),
                  ((0, 0), (left, right), (0, cip - c_in)))
    x_main = x_p[:, :nt * tls, :]
    halo_idx = (jnp.arange(nt)[:, None] + 1) * tls + jnp.arange(h)[None, :]
    x_halo = x_p[:, halo_idx, :]             # (n, nt, h, cip): tiny halo slab

    # --- fold BN (inference) scales into conv weights, shifts into a single bias
    s1, b1 = fold_bn(params["bn1"])
    s2, b2 = fold_bn(params["bn2"])
    w1 = jnp.transpose(params["w1"], (2, 1, 0)) * s1[None, None, :]   # (k, c_in, c_out)
    w1 = jnp.pad(w1, ((0, 0), (0, cip - c_in), (0, cop - c_out)))
    w2 = jnp.transpose(params["w2"], (2, 1, 0)) * s2[None, None, :]   # (k, c_out, c_out)
    w2 = jnp.pad(w2, ((0, 0), (0, cop - c_out), (0, cop - c_out)))
    sh1 = jnp.pad(b1, (0, cop - c_out))[None, :]
    shift2 = b2

    args = [x_main, x_halo, w1, w2]
    in_specs = [
        pl.BlockSpec((None, tls, cip), lambda nn, tt: (nn, tt, 0)),
        pl.BlockSpec((None, None, h, cip), lambda nn, tt: (nn, tt, 0, 0)),
        pl.BlockSpec((k, cip, cop), lambda nn, tt: (0, 0, 0)),
        pl.BlockSpec((k, cop, cop), lambda nn, tt: (0, 0, 0)),
    ]
    if use_res:
        ss, bs = fold_bn(params["bns"])
        ws = jnp.transpose(params["ws"], (2, 1, 0))[0] * ss[None, :]  # (c_in, c_out)
        ws = jnp.pad(ws, ((0, cip - c_in), (0, cop - c_out)))
        shift2 = shift2 + bs
        args.append(ws)
        in_specs.append(pl.BlockSpec((cip, cop), lambda nn, tt: (0, 0)))
    sh2 = jnp.pad(shift2, (0, cop - c_out))[None, :]
    args += [sh1, sh2]
    in_specs += [pl.BlockSpec((1, cop), lambda nn, tt: (0, 0)),
                 pl.BlockSpec((1, cop), lambda nn, tt: (0, 0))]

    kernel = functools.partial(_fused_residual_kernel, k=k, s=s, pad=pad, tl=tl,
                               tls=tls, hw=hw, l1=l1, use_res=use_res)

    flops = 2 * n * nt * (k * hw * cip * cop + k * tl * cop * cop
                          + (tl * cip * cop if use_res else 0))
    transcendentals = n * nt * (hw + tl) * cop
    bytes_accessed = 4 * (n * nt * ((tls + h) * cip + tl * cop)
                          + k * cip * cop + k * cop * cop
                          + (cip * cop if use_res else 0) + 2 * cop)

    out = pl.pallas_call(
        kernel,
        out_shape=jax.ShapeDtypeStruct((n, nt * tl, cop), jnp.float32),
        grid_spec=pltpu.PrefetchScalarGridSpec(
            num_scalar_prefetch=0,
            grid=(n, nt),
            in_specs=in_specs,
            out_specs=pl.BlockSpec((None, tl, cop), lambda nn, tt: (nn, tt, 0)),
            scratch_shapes=[pltpu.VMEM((tls + h, cip), jnp.float32),   # input window
                            pltpu.VMEM((hw, cop), jnp.float32)],       # h1 (+halo)
        ),
        compiler_params=pltpu.CompilerParams(
            dimension_semantics=("parallel", "parallel"),   # v7x: shard across 2 TCs
            vmem_limit_bytes=48 * 1024 * 1024,              # headroom under v7x 64 MiB
        ),
        cost_estimate=pl.CostEstimate(flops=flops,
                                      transcendentals=transcendentals,
                                      bytes_accessed=bytes_accessed),
    )(*args)

    out = out[:, :l1, :c_out]                # drop L-tile and channel padding
    return jnp.transpose(out, (0, 2, 1))     # -> NCL


# ---------------------------------------------------------------------------
# Pure-JAX reference (for correctness check)
# ---------------------------------------------------------------------------

def ref_forward(x_ncl, params, k, stride, use_res):
    def conv1d(x, w, s, padding):
        return lax.conv_general_dilated(
            x, w, (s,), [(padding, padding)],
            dimension_numbers=("NCH", "OIH", "NCH"))

    def bn(x, p, eps=1e-5):
        scale = p["gamma"] / jnp.sqrt(p["var"] + eps)
        shift = p["beta"] - p["mean"] * scale
        return x * scale[None, :, None] + shift[None, :, None]

    hmid = jnp.tanh(bn(conv1d(x_ncl, params["w1"], stride, k // 2), params["bn1"]))
    left = bn(conv1d(hmid, params["w2"], 1, k // 2), params["bn2"])
    if use_res:
        left = left + bn(conv1d(x_ncl, params["ws"], stride, 0), params["bns"])
    return jnp.tanh(left)


# ---------------------------------------------------------------------------
# Main
# ---------------------------------------------------------------------------

if __name__ == "__main__":
    N, C_IN, C_OUT, L = 2, 4, 8, 16
    K, STRIDE, USE_RES = 3, 2, True

    key = jax.random.PRNGKey(0)
    ks = jax.random.split(key, 16)

    def bn_params(k0, k1, k2, k3, c):
        return dict(
            gamma=1.0 + 0.1 * jax.random.normal(k0, (c,), jnp.float32),
            beta=0.1 * jax.random.normal(k1, (c,), jnp.float32),
            mean=0.1 * jax.random.normal(k2, (c,), jnp.float32),
            var=0.5 + jnp.abs(jax.random.normal(k3, (c,), jnp.float32)) * 0.5,
        )

    params = dict(
        w1=0.3 * jax.random.normal(ks[0], (C_OUT, C_IN, K), jnp.float32),
        w2=0.3 * jax.random.normal(ks[1], (C_OUT, C_OUT, K), jnp.float32),
        ws=0.3 * jax.random.normal(ks[2], (C_OUT, C_IN, 1), jnp.float32),
        bn1=bn_params(ks[3], ks[4], ks[5], ks[6], C_OUT),
        bn2=bn_params(ks[7], ks[8], ks[9], ks[10], C_OUT),
        bns=bn_params(ks[11], ks[12], ks[13], ks[14], C_OUT),
    )

    x = jax.random.normal(ks[15], (N, C_IN, L), jnp.float32)  # NCL, like PyTorch

    out = jax.block_until_ready(residual_block_forward(x, params, K, STRIDE, USE_RES))
    ref = jax.block_until_ready(ref_forward(x, params, K, STRIDE, USE_RES))
    assert out.shape == ref.shape, (out.shape, ref.shape)
    assert jnp.allclose(out, ref, atol=1e-4, rtol=1e-4), \
        float(jnp.max(jnp.abs(out - ref)))

    # Second config: longer sequence with a small tile -> exercises the multi-tile
    # grid, halo handling and edge masking.
    x2 = jax.random.normal(jax.random.PRNGKey(1), (N, C_IN, 64), jnp.float32)
    out2 = jax.block_until_ready(
        residual_block_forward(x2, params, K, STRIDE, USE_RES, tile_l=8))
    ref2 = jax.block_until_ready(ref_forward(x2, params, K, STRIDE, USE_RES))
    assert out2.shape == ref2.shape, (out2.shape, ref2.shape)
    assert jnp.allclose(out2, ref2, atol=1e-4, rtol=1e-4), \
        float(jnp.max(jnp.abs(out2 - ref2)))

    print("KERNEL_OK")
</pallas_src>

<mosaic_0001>
module attributes {stable_mosaic.version = 11 : i64} {
  func.func @_fused_residual_kernel(%arg0: i32, %arg1: i32, %arg2: memref<1x16x128xf32, #tpu.memory_space<vmem>>, %arg3: memref<1x1x24x128xf32, #tpu.memory_space<vmem>>, %arg4: memref<3x128x128xf32, #tpu.memory_space<vmem>>, %arg5: memref<3x128x128xf32, #tpu.memory_space<vmem>>, %arg6: memref<128x128xf32, #tpu.memory_space<vmem>>, %arg7: memref<1x128xf32, #tpu.memory_space<vmem>>, %arg8: memref<1x128xf32, #tpu.memory_space<vmem>>, %arg9: memref<1x8x128xf32, #tpu.memory_space<vmem>>, %arg10: memref<40x128xf32, #tpu.memory_space<vmem>>, %arg11: memref<16x128xf32, #tpu.memory_space<vmem>>) attributes {dimension_semantics = [#tpu.dimension_semantics<parallel>, #tpu.dimension_semantics<parallel>], iteration_bounds = array<i64: 2, 1>, scalar_prefetch = 0 : i64, scratch_operands = 2 : i64, tpu.core_type = #tpu.core_type<tc>, window_params = [{transform_indices = @transform_0, window_bounds = array<i64: 1, 16, 128>}, {transform_indices = @transform_1, window_bounds = array<i64: 1, 1, 24, 128>}, {pipeline_mode = #tpu.pipeline_mode<synchronous>, transform_indices = @transform_2, window_bounds = array<i64: 3, 128, 128>}, {pipeline_mode = #tpu.pipeline_mode<synchronous>, transform_indices = @transform_3, window_bounds = array<i64: 3, 128, 128>}, {pipeline_mode = #tpu.pipeline_mode<synchronous>, transform_indices = @transform_4, window_bounds = array<i64: 128, 128>}, {pipeline_mode = #tpu.pipeline_mode<synchronous>, transform_indices = @transform_5, window_bounds = array<i64: 1, 128>}, {pipeline_mode = #tpu.pipeline_mode<synchronous>, transform_indices = @transform_6, window_bounds = array<i64: 1, 128>}, {transform_indices = @transform_7, window_bounds = array<i64: 1, 8, 128>}]} {
    %c8_i32 = arith.constant 8 : i32
    %0 = arith.muli %arg1, %c8_i32 : i32
    %c0 = arith.constant 0 : index
    %c0_0 = arith.constant 0 : index
    %c0_1 = arith.constant 0 : index
    %1 = vector.load %arg2[%c0, %c0_0, %c0_1] : memref<1x16x128xf32, #tpu.memory_space<vmem>>, vector<1x16x128xf32>
    %2 = vector.shape_cast %1 : vector<1x16x128xf32> to vector<16x128xf32>
    %c0_2 = arith.constant 0 : index
    %c0_3 = arith.constant 0 : index
    %3 = vector.load %arg10[%c0_2, %c0_3] : memref<40x128xf32, #tpu.memory_space<vmem>>, vector<16x128xf32>
    tpu.vector_store %arg10[%c0_2, %c0_3], %2 {strides = array<i32>} : memref<40x128xf32, #tpu.memory_space<vmem>>, vector<16x128xf32>,
    %c0_4 = arith.constant 0 : index
    %c0_5 = arith.constant 0 : index
    %c0_6 = arith.constant 0 : index
    %c0_7 = arith.constant 0 : index
    %4 = vector.load %arg3[%c0_4, %c0_5, %c0_6, %c0_7] : memref<1x1x24x128xf32, #tpu.memory_space<vmem>>, vector<1x1x24x128xf32>
    %5 = vector.shape_cast %4 : vector<1x1x24x128xf32> to vector<24x128xf32>
    %c16 = arith.constant 16 : index
    %c0_8 = arith.constant 0 : index
    %6 = vector.load %arg10[%c16, %c0_8] : memref<40x128xf32, #tpu.memory_space<vmem>>, vector<24x128xf32>
    tpu.vector_store %arg10[%c16, %c0_8], %5 {strides = array<i32>} : memref<40x128xf32, #tpu.memory_space<vmem>>, vector<24x128xf32>,
    %c0_9 = arith.constant 0 : index
    %c0_10 = arith.constant 0 : index
    %7 = tpu.strided_load %arg10[%c0_9, %c0_10] {strides = array<i32: 2, 1>} : memref<40x128xf32, #tpu.memory_space<vmem>>, vector<16x128xf32>
    %c0_11 = arith.constant 0 : index
    %c0_12 = arith.constant 0 : index
    %c0_13 = arith.constant 0 : index
    %8 = vector.load %arg4[%c0_11, %c0_12, %c0_13] : memref<3x128x128xf32, #tpu.memory_space<vmem>>, vector<1x128x128xf32>
    %9 = vector.shape_cast %8 : vector<1x128x128xf32> to vector<128x128xf32>
    %cst = arith.constant dense<0.000000e+00> : vector<16x128xf32>
    %10 = tpu.matmul %7, %9, %cst {dimension_numbers = #tpu.dot_dimension_numbers<[1], [0], [0], [1], [0, 0, 1, 1], [], []>} : vector<16x128xf32>, vector<128x128xf32>, vector<16x128xf32> -> vector<16x128xf32>
    %c1 = arith.constant 1 : index
    %c0_14 = arith.constant 0 : index
    %11 = tpu.strided_load %arg10[%c1, %c0_14] {strides = array<i32: 2, 1>} : memref<40x128xf32, #tpu.memory_space<vmem>>, vector<16x128xf32>
    %c1_15 = arith.constant 1 : index
    %c0_16 = arith.constant 0 : index
    %c0_17 = arith.constant 0 : index
    %12 = vector.load %arg4[%c1_15, %c0_16, %c0_17] : memref<3x128x128xf32, #tpu.memory_space<vmem>>, vector<1x128x128xf32>
    %13 = vector.shape_cast %12 : vector<1x128x128xf32> to vector<128x128xf32>
    %cst_18 = arith.constant dense<0.000000e+00> : vector<16x128xf32>
    %14 = tpu.matmul %11, %13, %cst_18 {dimension_numbers = #tpu.dot_dimension_numbers<[1], [0], [0], [1], [0, 0, 1, 1], [], []>} : vector<16x128xf32>, vector<128x128xf32>, vector<16x128xf32> -> vector<16x128xf32>
    %15 = arith.addf %10, %14 : vector<16x128xf32>
    %c2 = arith.constant 2 : index
    %c0_19 = arith.constant 0 : index
    %16 = tpu.strided_load %arg10[%c2, %c0_19] {strides = array<i32: 2, 1>} : memref<40x128xf32, #tpu.memory_space<vmem>>, vector<16x128xf32>
    %c2_20 = arith.constant 2 : index
    %c0_21 = arith.constant 0 : index
    %c0_22 = arith.constant 0 : index
    %17 = vector.load %arg4[%c2_20, %c0_21, %c0_22] : memref<3x128x128xf32, #tpu.memory_space<vmem>>, vector<1x128x128xf32>
    %18 = vector.shape_cast %17 : vector<1x128x128xf32> to vector<128x128xf32>
    %cst_23 = arith.constant dense<0.000000e+00> : vector<16x128xf32>
    %19 = tpu.matmul %16, %18, %cst_23 {dimension_numbers = #tpu.dot_dimension_numbers<[1], [0], [0], [1], [0, 0, 1, 1], [], []>} : vector<16x128xf32>, vector<128x128xf32>, vector<16x128xf32> -> vector<16x128xf32>
    %20 = arith.addf %15, %19 : vector<16x128xf32>
    %c0_24 = arith.constant 0 : index
    %c0_25 = arith.constant 0 : index
    %21 = vector.load %arg7[%c0_24, %c0_25] : memref<1x128xf32, #tpu.memory_space<vmem>>, vector<1x128xf32>
    %22 = vector.broadcast %21 : vector<1x128xf32> to vector<16x128xf32>
    %23 = arith.addf %20, %22 : vector<16x128xf32>
    %24 = math.tanh %23 : vector<16x128xf32>
    %25 = tpu.iota {dimensions = array<i32: 0>} : vector<16x1xi32>
    %c1_i32 = arith.constant 1 : i32
    %26 = arith.subi %0, %c1_i32 : i32
    %27 = vector.broadcast %26 : i32 to vector<16x1xi32>
    %28 = arith.addi %25, %27 : vector<16x1xi32>
    %c0_i32 = arith.constant 0 : i32
    %29 = vector.broadcast %c0_i32 : i32 to vector<16x1xi32>
    %30 = arith.cmpi sge, %28, %29 : vector<16x1xi32>
    %c8_i32_26 = arith.constant 8 : i32
    %31 = vector.broadcast %c8_i32_26 : i32 to vector<16x1xi32>
    %32 = arith.cmpi slt, %28, %31 : vector<16x1xi32>
    %33 = arith.andi %30, %32 : vector<16x1xi1>
    %cst_27 = arith.constant 0.000000e+00 : f32
    %34 = vector.shape_cast %33 : vector<16x1xi1> to vector<16x1xi1>
    %35 = vector.broadcast %34 : vector<16x1xi1> to vector<16x128xi1>
    %36 = vector.broadcast %cst_27 : f32 to vector<16x128xf32>
    %37 = arith.select %35, %24, %36 : vector<16x128xi1>, vector<16x128xf32>
    %c0_28 = arith.constant 0 : index
    %c0_29 = arith.constant 0 : index
    %38 = vector.load %arg11[%c0_28, %c0_29] : memref<16x128xf32, #tpu.memory_space<vmem>>, vector<16x128xf32>
    tpu.vector_store %arg11[%c0_28, %c0_29], %37 {strides = array<i32>} : memref<16x128xf32, #tpu.memory_space<vmem>>, vector<16x128xf32>,
    %c0_30 = arith.constant 0 : index
    %c0_31 = arith.constant 0 : index
    %39 = vector.load %arg11[%c0_30, %c0_31] : memref<16x128xf32, #tpu.memory_space<vmem>>, vector<8x128xf32>
    %c0_32 = arith.constant 0 : index
    %c0_33 = arith.constant 0 : index
    %c0_34 = arith.constant 0 : index
    %40 = vector.load %arg5[%c0_32, %c0_33, %c0_34] : memref<3x128x128xf32, #tpu.memory_space<vmem>>, vector<1x128x128xf32>
    %41 = vector.shape_cast %40 : vector<1x128x128xf32> to vector<128x128xf32>
    %cst_35 = arith.constant dense<0.000000e+00> : vector<8x128xf32>
    %42 = tpu.matmul %39, %41, %cst_35 {dimension_numbers = #tpu.dot_dimension_numbers<[1], [0], [0], [1], [0, 0, 1, 1], [], []>} : vector<8x128xf32>, vector<128x128xf32>, vector<8x128xf32> -> vector<8x128xf32>
    %c1_36 = arith.constant 1 : index
    %c0_37 = arith.constant 0 : index
    %43 = vector.load %arg11[%c1_36, %c0_37] : memref<16x128xf32, #tpu.memory_space<vmem>>, vector<8x128xf32>
    %c1_38 = arith.constant 1 : index
    %c0_39 = arith.constant 0 : index
    %c0_40 = arith.constant 0 : index
    %44 = vector.load %arg5[%c1_38, %c0_39, %c0_40] : memref<3x128x128xf32, #tpu.memory_space<vmem>>, vector<1x128x128xf32>
    %45 = vector.shape_cast %44 : vector<1x128x128xf32> to vector<128x128xf32>
    %cst_41 = arith.constant dense<0.000000e+00> : vector<8x128xf32>
    %46 = tpu.matmul %43, %45, %cst_41 {dimension_numbers = #tpu.dot_dimension_numbers<[1], [0], [0], [1], [0, 0, 1, 1], [], []>} : vector<8x128xf32>, vector<128x128xf32>, vector<8x128xf32> -> vector<8x128xf32>
    %47 = arith.addf %42, %46 : vector<8x128xf32>
    %c2_42 = arith.constant 2 : index
    %c0_43 = arith.constant 0 : index
    %48 = vector.load %arg11[%c2_42, %c0_43] : memref<16x128xf32, #tpu.memory_space<vmem>>, vector<8x128xf32>
    %c2_44 = arith.constant 2 : index
    %c0_45 = arith.constant 0 : index
    %c0_46 = arith.constant 0 : index
    %49 = vector.load %arg5[%c2_44, %c0_45, %c0_46] : memref<3x128x128xf32, #tpu.memory_space<vmem>>, vector<1x128x128xf32>
    %50 = vector.shape_cast %49 : vector<1x128x128xf32> to vector<128x128xf32>
    %cst_47 = arith.constant dense<0.000000e+00> : vector<8x128xf32>
    %51 = tpu.matmul %48, %50, %cst_47 {dimension_numbers = #tpu.dot_dimension_numbers<[1], [0], [0], [1], [0, 0, 1, 1], [], []>} : vector<8x128xf32>, vector<128x128xf32>, vector<8x128xf32> -> vector<8x128xf32>
    %52 = arith.addf %47, %51 : vector<8x128xf32>
    %c3 = arith.constant 3 : index
    %c0_48 = arith.constant 0 : index
    %53 = tpu.strided_load %arg10[%c3, %c0_48] {strides = array<i32: 2, 1>} : memref<40x128xf32, #tpu.memory_space<vmem>>, vector<8x128xf32>
    %c0_49 = arith.constant 0 : index
    %c0_50 = arith.constant 0 : index
    %54 = vector.load %arg6[%c0_49, %c0_50] : memref<128x128xf32, #tpu.memory_space<vmem>>, vector<128x128xf32>
    %cst_51 = arith.constant dense<0.000000e+00> : vector<8x128xf32>
    %55 = tpu.matmul %53, %54, %cst_51 {dimension_numbers = #tpu.dot_dimension_numbers<[1], [0], [0], [1], [0, 0, 1, 1], [], []>} : vector<8x128xf32>, vector<128x128xf32>, vector<8x128xf32> -> vector<8x128xf32>
    %56 = arith.addf %52, %55 : vector<8x128xf32>
    %c0_52 = arith.constant 0 : index
    %c0_53 = arith.constant 0 : index
    %57 = vector.load %arg8[%c0_52, %c0_53] : memref<1x128xf32, #tpu.memory_space<vmem>>, vector<1x128xf32>
    %58 = vector.broadcast %57 : vector<1x128xf32> to vector<8x128xf32>
    %59 = arith.addf %56, %58 : vector<8x128xf32>
    %60 = math.tanh %59 : vector<8x128xf32>
    %c0_54 = arith.constant 0 : index
    %c0_55 = arith.constant 0 : index
    %c0_56 = arith.constant 0 : index
    %61 = vector.load %arg9[%c0_54, %c0_55, %c0_56] : memref<1x8x128xf32, #tpu.memory_space<vmem>>, vector<1x8x128xf32>
    %62 = vector.shape_cast %61 : vector<1x8x128xf32> to vector<8x128xf32>
    %63 = vector.shape_cast %60 : vector<8x128xf32> to vector<1x8x128xf32>
    tpu.vector_store %arg9[%c0_54, %c0_55, %c0_56], %63 {strides = array<i32>} : memref<1x8x128xf32, #tpu.memory_space<vmem>>, vector<1x8x128xf32>,
    return
  }
  func.func @transform_0(%arg0: i32, %arg1: i32) -> (i32, i32, i32) {
    %c0_i32 = arith.constant 0 : i32
    %c0_i32_0 = arith.constant 0 : i32
    return %arg0, %arg1, %c0_i32 : i32, i32, i32
  }
  func.func @transform_1(%arg0: i32, %arg1: i32) -> (i32, i32, i32, i32) {
    %c0_i32 = arith.constant 0 : i32
    %c0_i32_0 = arith.constant 0 : i32
    %c0_i32_1 = arith.constant 0 : i32
    return %arg0, %arg1, %c0_i32, %c0_i32_0 : i32, i32, i32, i32
  }
  func.func @transform_2(%arg0: i32, %arg1: i32) -> (i32, i32, i32) {
    %c0_i32 = arith.constant 0 : i32
    %c0_i32_0 = arith.constant 0 : i32
    %c0_i32_1 = arith.constant 0 : i32
    %c0_i32_2 = arith.constant 0 : i32
    return %c0_i32, %c0_i32_0, %c0_i32_1 : i32, i32, i32
  }
  func.func @transform_3(%arg0: i32, %arg1: i32) -> (i32, i32, i32) {
    %c0_i32 = arith.constant 0 : i32
    %c0_i32_0 = arith.constant 0 : i32
    %c0_i32_1 = arith.constant 0 : i32
    %c0_i32_2 = arith.constant 0 : i32
    return %c0_i32, %c0_i32_0, %c0_i32_1 : i32, i32, i32
  }
  func.func @transform_4(%arg0: i32, %arg1: i32) -> (i32, i32) {
    %c0_i32 = arith.constant 0 : i32
    %c0_i32_0 = arith.constant 0 : i32
    %c0_i32_1 = arith.constant 0 : i32
    return %c0_i32, %c0_i32_0 : i32, i32
  }
  func.func @transform_5(%arg0: i32, %arg1: i32) -> (i32, i32) {
    %c0_i32 = arith.constant 0 : i32
    %c0_i32_0 = arith.constant 0 : i32
    %c0_i32_1 = arith.constant 0 : i32
    return %c0_i32, %c0_i32_0 : i32, i32
  }
  func.func @transform_6(%arg0: i32, %arg1: i32) -> (i32, i32) {
    %c0_i32 = arith.constant 0 : i32
    %c0_i32_0 = arith.constant 0 : i32
    %c0_i32_1 = arith.constant 0 : i32
    return %c0_i32, %c0_i32_0 : i32, i32
  }
  func.func @transform_7(%arg0: i32, %arg1: i32) -> (i32, i32, i32) {
    %c0_i32 = arith.constant 0 : i32
    %c0_i32_0 = arith.constant 0 : i32
    return %arg0, %arg1, %c0_i32 : i32, i32, i32
  }
}

</mosaic_0001>

<llo_original>
// kernel: tpu_custom_call.1
$region0: #{tpu_custom_call.1}
  #allocation0 [shape = 'u32[]', space=smem, size = 0x4, offset = 0x4, fixed_abs, tag = 'smem constant byte address 0x4 - core index']
  #allocation1 [shape = 'u32[144,128]{1,0:T(1,128)}', space=vmem, size = 0x12000, scoped, tag = 'internal scratch']
  #allocation2 [shape = 'f32[40,128]{1,0:T(8,128)}', space=vmem, size = 0x5000, scoped, tag = 'scratch operand']
  #allocation3 [shape = 'f32[16,128]{1,0:T(8,128)}', space=vmem, size = 0x2000, scoped, tag = 'scratch operand']
  %s0 = inlined_call_operand.hbm [shape: f32[2,16,128], index: 0, kind: input, shape index: {}]
  %s1 = inlined_call_operand.hbm [shape: f32[2,1,24,128], index: 1, kind: input, shape index: {}]
  %s2 = inlined_call_operand.hbm [shape: f32[3,128,128], index: 2, kind: input, shape index: {}]
  %s3 = inlined_call_operand.hbm [shape: f32[3,128,128], index: 3, kind: input, shape index: {}]
  %s4 = inlined_call_operand.hbm [shape: f32[128,128], index: 4, kind: input, shape index: {}]
  %s5 = inlined_call_operand.vmem [shape: f32[1,128], index: 5, kind: input, shape index: {}]
  %s6 = inlined_call_operand.vmem [shape: f32[1,128], index: 6, kind: input, shape index: {}]
  %s7 = inlined_call_operand.hbm [shape: f32[2,8,128], index: 7, kind: output, shape index: {}]
  %s8 = sld [smem:[#allocation0]]
  $region81: #{tpu_custom_call.1} parent=0
    _
  %s10 = ssub.s32 1, %s8
  %s11 = scalar_select 0, %s10, %s8
  $region1: #{tpu_custom_call.1} parent=0
    #allocation4 [shape = 'u8[16384]{0}', space=vmem, size = 0x4000, scoped, tag = 'input window, operand 0']
    #allocation5 [shape = 's32[2]{0}', space=sflag, size = 0x8, scoped, tag = 'scoped memory for tpu_custom_call.1']
    #allocation6 [shape = 's32[2]{0}', space=sflag, size = 0x8, scoped, tag = 'scoped memory for tpu_custom_call.1']
    #allocation7 [shape = 'u8[24576]{0}', space=vmem, size = 0x6000, scoped, tag = 'input window, operand 1']
    #allocation8 [shape = 's32[2]{0}', space=sflag, size = 0x8, scoped, tag = 'scoped memory for tpu_custom_call.1']
    #allocation9 [shape = 'u8[196608]{0}', space=vmem, size = 0x30000, scoped, tag = 'input window, operand 2, single buffered']
    #allocation10 [shape = 'u8[196608]{0}', space=vmem, size = 0x30000, scoped, tag = 'input window, operand 3, single buffered']
    #allocation11 [shape = 's32[1]{0}', space=sflag, size = 0x4, scoped, tag = 'scoped memory for tpu_custom_call.1']
    #allocation12 [shape = 'u8[65536]{0}', space=vmem, size = 0x10000, scoped, tag = 'input window, operand 4, single buffered']
    #allocation13 [shape = 'u8[8192]{0}', space=vmem, size = 0x2000, scoped, tag = 'output window, operand 0']
    %12 = vsyncpa [#allocation5], 0
    %s13 = scalar_lea.sflag [#allocation5], 1
    %14 = vsyncpa %s13, 0
    %15 = vsyncpa [#allocation8], 0
    %s16 = scalar_lea.sflag [#allocation8], 1
    %17 = vsyncpa %s16, 0
    %18 = vsyncpa [#allocation11], 0
    %19 = vsyncpa [#allocation6], 0
    %s20 = scalar_lea.sflag [#allocation6], 1
    %21 = vsyncpa %s20, 0
    loop: start=0, step=1, limit=4
    $region2: #{tpu_custom_call.1} parent=1 // loop_pre_header
      _
    $region3: #{tpu_custom_call.1} parent=1 // loop_header
      %s23 = sphi 0, %s27
      %p24 = scmp.ge.s32.totalorder %s23, 4
      %s30 = sphi 0, %s42
      %s31 = sphi 0, %s38
      %s32 = sphi 0, %s30
      %s33 = sphi 0, %s31
      %s34 = sphi 0, %s32
      %s35 = sphi 0, %s33
      %s47 = sphi 0, %s49
      %s50 = sphi 0, %s47
      %s51 = sphi 0, %s50
      %s67 = sphi 0, %s51
      %s75 = sphi 0, %s77
      %s78 = sphi 0, %s75
      %s79 = sphi 0, %s78
      %s95 = sphi 0, %s79
      %s99 = sphi 0, %s99
      %s101 = sphi 0, %s99
      %s102 = sphi 0, %s101
      %s116 = sphi 0, %s102
      %s120 = sphi 0, %s120
      %s122 = sphi 0, %s120
      %s123 = sphi 0, %s122
      %s137 = sphi 0, %s123
      %s141 = sphi 0, %s141
      %s143 = sphi 0, %s141
      %s144 = sphi 0, %s143
      %s158 = sphi 0, %s144
      %s162 = sphi 0, %s162
      %s164 = sphi 0, %s162
      %s165 = sphi 0, %s164
      %s179 = sphi 0, %s165
      %s183 = sphi 0, %s183
      %s185 = sphi 0, %s183
      %s186 = sphi 0, %s185
      %s200 = sphi 0, %s186
      %s208 = sphi 0, %s210
      %s211 = sphi 0, %s208
      %s212 = sphi 0, %s211
      %s228 = sphi 0, %s212
    $region4: #{tpu_custom_call.1} parent=1 // loop_header_branch
      %26 = sbr.rel (%p24) target = $region8
    $region5: #{tpu_custom_call.1} parent=1 // loop_body
      %s28 = ssub.s32 %s23, 1
      %s29 = ssub.s32 %s23, 2
      %s36 = sadd.s32 1, %s31
      %p37 = scmp.ge.s32.totalorder %s36, 1
      %s38 = scalar_select %p37, 0, %s36
      %s39 = sadd.s32 1, %s30
      %s40 = scalar_select %p37, %s39, %s30
      %p41 = scmp.ge.s32.totalorder %s40, 2
      %s42 = scalar_select %p41, 0, %s40
      %s43 = ssub.s32 %s30, %s42
      %s44 = ssub.s32 %s31, %s38
      %s45 = sor.u32 %s43, %s44
      %p46 = scmp.eq.s32.totalorder %s45, 0
      %s48 = sadd.s32 %s47, 1
      %s49 = scalar_select %p46, %s47, %s48
      %p52 = pneg %p46
      %p53 = scmp.eq.s32.totalorder %s23, 1
      %p54 = por %p52, %p53
      %p55 = scmp.ne.s32.totalorder %s47, %s50
      %p56 = scmp.eq.s32.totalorder %s23, 0
      %p57 = por %p55, %p56
      %p58 = scmp.ne.s32.totalorder %s47, %s50
      %p59 = scmp.eq.s32.totalorder %s28, 1
      %p60 = por %p58, %p59
      %p61 = scmp.ne.s32.totalorder %s50, %s51
      %p62 = scmp.eq.s32.totalorder %s28, 0
      %p63 = por %p61, %p62
      %p64 = scmp.ne.s32.totalorder %s50, %s51
      %p65 = scmp.eq.s32.totalorder %s29, 1
      %p66 = por %p64, %p65
      %p68 = scmp.ne.s32.totalorder %s51, %s67
      %p69 = scmp.eq.s32.totalorder %s29, 0
      %p70 = por %p68, %p69
      %s71 = ssub.s32 %s30, %s42
      %s72 = ssub.s32 %s31, %s38
      %s73 = sor.u32 %s71, %s72
      %p74 = scmp.eq.s32.totalorder %s73, 0
      %s76 = sadd.s32 %s75, 1
      %s77 = scalar_select %p74, %s75, %s76
      %p80 = pneg %p74
      %p81 = scmp.eq.s32.totalorder %s23, 1
      %p82 = por %p80, %p81
      %p83 = scmp.ne.s32.totalorder %s75, %s78
      %p84 = scmp.eq.s32.totalorder %s23, 0
      %p85 = por %p83, %p84
      %p86 = scmp.ne.s32.totalorder %s75, %s78
      %p87 = scmp.eq.s32.totalorder %s28, 1
      %p88 = por %p86, %p87
      %p89 = scmp.ne.s32.totalorder %s78, %s79
      %p90 = scmp.eq.s32.totalorder %s28, 0
      %p91 = por %p89, %p90
      %p92 = scmp.ne.s32.totalorder %s78, %s79
      %p93 = scmp.eq.s32.totalorder %s29, 1
      %p94 = por %p92, %p93
      %p96 = scmp.ne.s32.totalorder %s79, %s95
      %p97 = scmp.eq.s32.totalorder %s29, 0
      %p98 = por %p96, %p97
      %s100 = sadd.s32 %s99, 1
      %p103 = scmp.eq.s32.totalorder %s23, 1
      %p104 = scmp.ne.s32.totalorder %s99, %s101
      %p105 = scmp.eq.s32.totalorder %s23, 0
      %p106 = por %p104, %p105
      %p107 = scmp.ne.s32.totalorder %s99, %s101
      %p108 = scmp.eq.s32.totalorder %s28, 1
      %p109 = por %p107, %p108
      %p110 = scmp.ne.s32.totalorder %s101, %s102
      %p111 = scmp.eq.s32.totalorder %s28, 0
      %p112 = por %p110, %p111
      %p113 = scmp.ne.s32.totalorder %s101, %s102
      %p114 = scmp.eq.s32.totalorder %s29, 1
      %p115 = por %p113, %p114
      %p117 = scmp.ne.s32.totalorder %s102, %s116
      %p118 = scmp.eq.s32.totalorder %s29, 0
      %p119 = por %p117, %p118
      %s121 = sadd.s32 %s120, 1
      %p124 = scmp.eq.s32.totalorder %s23, 1
      %p125 = scmp.ne.s32.totalorder %s120, %s122
      %p126 = scmp.eq.s32.totalorder %s23, 0
      %p127 = por %p125, %p126
      %p128 = scmp.ne.s32.totalorder %s120, %s122
      %p129 = scmp.eq.s32.totalorder %s28, 1
      %p130 = por %p128, %p129
      %p131 = scmp.ne.s32.totalorder %s122, %s123
      %p132 = scmp.eq.s32.totalorder %s28, 0
      %p133 = por %p131, %p132
      %p134 = scmp.ne.s32.totalorder %s122, %s123
      %p135 = scmp.eq.s32.totalorder %s29, 1
      %p136 = por %p134, %p135
      %p138 = scmp.ne.s32.totalorder %s123, %s137
      %p139 = scmp.eq.s32.totalorder %s29, 0
      %p140 = por %p138, %p139
      %s142 = sadd.s32 %s141, 1
      %p145 = scmp.eq.s32.totalorder %s23, 1
      %p146 = scmp.ne.s32.totalorder %s141, %s143
      %p147 = scmp.eq.s32.totalorder %s23, 0
      %p148 = por %p146, %p147
      %p149 = scmp.ne.s32.totalorder %s141, %s143
      %p150 = scmp.eq.s32.totalorder %s28, 1
      %p151 = por %p149, %p150
      %p152 = scmp.ne.s32.totalorder %s143, %s144
      %p153 = scmp.eq.s32.totalorder %s28, 0
      %p154 = por %p152, %p153
      %p155 = scmp.ne.s32.totalorder %s143, %s144
      %p156 = scmp.eq.s32.totalorder %s29, 1
      %p157 = por %p155, %p156
      %p159 = scmp.ne.s32.totalorder %s144, %s158
      %p160 = scmp.eq.s32.totalorder %s29, 0
      %p161 = por %p159, %p160
      %s163 = sadd.s32 %s162, 1
      %p166 = scmp.eq.s32.totalorder %s23, 1
      %p167 = scmp.ne.s32.totalorder %s162, %s164
      %p168 = scmp.eq.s32.totalorder %s23, 0
      %p169 = por %p167, %p168
      %p170 = scmp.ne.s32.totalorder %s162, %s164
      %p171 = scmp.eq.s32.totalorder %s28, 1
      %p172 = por %p170, %p171
      %p173 = scmp.ne.s32.totalorder %s164, %s165
      %p174 = scmp.eq.s32.totalorder %s28, 0
      %p175 = por %p173, %p174
      %p176 = scmp.ne.s32.totalorder %s164, %s165
      %p177 = scmp.eq.s32.totalorder %s29, 1
      %p178 = por %p176, %p177
      %p180 = scmp.ne.s32.totalorder %s165, %s179
      %p181 = scmp.eq.s32.totalorder %s29, 0
      %p182 = por %p180, %p181
      %s184 = sadd.s32 %s183, 1
      %p187 = scmp.eq.s32.totalorder %s23, 1
      %p188 = scmp.ne.s32.totalorder %s183, %s185
      %p189 = scmp.eq.s32.totalorder %s23, 0
      %p190 = por %p188, %p189
      %p191 = scmp.ne.s32.totalorder %s183, %s185
      %p192 = scmp.eq.s32.totalorder %s28, 1
      %p193 = por %p191, %p192
      %p194 = scmp.ne.s32.totalorder %s185, %s186
      %p195 = scmp.eq.s32.totalorder %s28, 0
      %p196 = por %p194, %p195
      %p197 = scmp.ne.s32.totalorder %s185, %s186
      %p198 = scmp.eq.s32.totalorder %s29, 1
      %p199 = por %p197, %p198
      %p201 = scmp.ne.s32.totalorder %s186, %s200
      %p202 = scmp.eq.s32.totalorder %s29, 0
      %p203 = por %p201, %p202
      %s204 = ssub.s32 %s30, %s42
      %s205 = ssub.s32 %s31, %s38
      %s206 = sor.u32 %s204, %s205
      %p207 = scmp.eq.s32.totalorder %s206, 0
      %s209 = sadd.s32 %s208, 1
      %s210 = scalar_select %p207, %s208, %s209
      %p213 = pneg %p207
      %p214 = scmp.eq.s32.totalorder %s23, 1
      %p215 = por %p213, %p214
      %p216 = scmp.ne.s32.totalorder %s208, %s211
      %p217 = scmp.eq.s32.totalorder %s23, 0
      %p218 = por %p216, %p217
      %p219 = scmp.ne.s32.totalorder %s208, %s211
      %p220 = scmp.eq.s32.totalorder %s28, 1
      %p221 = por %p219, %p220
      %p222 = scmp.ne.s32.totalorder %s211, %s212
      %p223 = scmp.eq.s32.totalorder %s28, 0
      %p224 = por %p222, %p223
      %p225 = scmp.ne.s32.totalorder %s211, %s212
      %p226 = scmp.eq.s32.totalorder %s29, 1
      %p227 = por %p225, %p226
      %p229 = scmp.ne.s32.totalorder %s212, %s228
      %p230 = scmp.eq.s32.totalorder %s29, 0
      %p231 = por %p229, %p230
      %p232 = scmp.le.s32.totalorder 1, %s23
      %p233 = scmp.lt.s32.totalorder %s23, 3
      %p234 = pnand %p232, %p233
      %p235 = pneg %p234
      // Predicated region
      $region9: #{tpu_custom_call.1} parent=5 // pred_check
        _
      $region10: #{tpu_custom_call.1} parent=5 // pred_check_branch
        %237 = sbr.rel (%p234) target = $region12
      $region11: #{tpu_custom_call.1} parent=5 // pred_region
        %s238 = ssub.s32 %s23, 1
        // Predicated region
        $region13: #{tpu_custom_call.1} parent=11 // pred_check
          %p239 = pneg %p112
        $region14: #{tpu_custom_call.1} parent=11 // pred_check_branch
          %241 = sbr.rel (%p239) target = $region16
        $region15: #{tpu_custom_call.1} parent=11 // pred_region
          %s243 = ssub.s32 6144, 6144
          %244 = vsyncadd [#allocation8], %s243
          %s245 = sshll.u32 [#allocation9], 4
          %s246 = int_to_ptr.vmem [resolvable:$true] %s245
          %251 = dma.hbm_to_vmem [thread:$0]  %s2, 6144, %s246, [#allocation8], 128, 128, 8
        $region16: #{tpu_custom_call.1} parent=11 // pred_fallthru
          _
        // Predicated region
        $region17: #{tpu_custom_call.1} parent=11 // pred_check
          %p252 = pneg %p133
        $region18: #{tpu_custom_call.1} parent=11 // pred_check_branch
          %254 = sbr.rel (%p252) target = $region20
        $region19: #{tpu_custom_call.1} parent=11 // pred_region
          %s256 = ssub.s32 6144, 6144
          %257 = vsyncadd [#allocation11], %s256
          %s258 = sshll.u32 [#allocation10], 4
          %s259 = int_to_ptr.vmem [resolvable:$true] %s258
          %264 = dma.hbm_to_vmem [thread:$0]  %s3, 6144, %s259, [#allocation11], 128, 128, 8
        $region20: #{tpu_custom_call.1} parent=11 // pred_fallthru
          _
        // Predicated region
        $region21: #{tpu_custom_call.1} parent=11 // pred_check
          %p265 = pneg %p154
        $region22: #{tpu_custom_call.1} parent=11 // pred_check_branch
          %267 = sbr.rel (%p265) target = $region24
        $region23: #{tpu_custom_call.1} parent=11 // pred_region
          %s269 = ssub.s32 2048, 2048
          %270 = vsyncadd [#allocation11], %s269
          %s271 = sshll.u32 [#allocation12], 4
          %s272 = int_to_ptr.vmem [resolvable:$true] %s271
          %277 = dma.hbm_to_vmem [thread:$0]  %s4, 2048, %s272, [#allocation11], 128, 128, 8
        $region24: #{tpu_custom_call.1} parent=11 // pred_fallthru
          _
        // Predicated region
        $region25: #{tpu_custom_call.1} parent=11 // pred_check
          %p278 = pneg %p175
        $region26: #{tpu_custom_call.1} parent=11 // pred_check_branch
          %280 = sbr.rel (%p278) target = $region28
        $region27: #{tpu_custom_call.1} parent=11 // pred_region
          _
        $region28: #{tpu_custom_call.1} parent=11 // pred_fallthru
          _
        // Predicated region
        $region29: #{tpu_custom_call.1} parent=11 // pred_check
          %p281 = pneg %p196
        $region30: #{tpu_custom_call.1} parent=11 // pred_check_branch
          %283 = sbr.rel (%p281) target = $region32
        $region31: #{tpu_custom_call.1} parent=11 // pred_region
          _
        $region32: #{tpu_custom_call.1} parent=11 // pred_fallthru
          _
      $region12: #{tpu_custom_call.1} parent=5 // pred_fallthru
        _
      %p284 = scmp.lt.s32.totalorder %s23, 2
      // Predicated region
      $region33: #{tpu_custom_call.1} parent=5 // pred_check
        %p285 = pneg %p284
      $region34: #{tpu_custom_call.1} parent=5 // pred_check_branch
        %287 = sbr.rel (%p285) target = $region36
      $region35: #{tpu_custom_call.1} parent=5 // pred_region
        // Predicated region
        $region37: #{tpu_custom_call.1} parent=35 // pred_check
          %p288 = pneg %p57
        $region38: #{tpu_custom_call.1} parent=35 // pred_check_branch
          %290 = sbr.rel (%p288) target = $region40
        $region39: #{tpu_custom_call.1} parent=35 // pred_region
          %s291 = sand.u32 %s47, 1
          %s292 = scalar_lea.sflag [#allocation5], %s291
          %s293 = sand.u32 %s47, 1
          %s294 = smul.addr %s293, 16
          %s295 = scalar_lea.vmem [#allocation4], %s294
          %s296 = smul.u32 2, %s31
          %s298 = ssub.s32 256, 256
          %299 = vsyncadd %s292, %s298
          %s300 = smul.addr %s30, 2
          %s301 = sadd.s32 %s296, %s300
          %s302 = smul.addr %s301, 128
          %s303 = scalar_lea.hbm %s0, %s302
          %s304 = sshll.u32 %s295, 4
          %s305 = int_to_ptr.vmem [resolvable:$true] %s304
          %310 = dma.hbm_to_vmem [thread:$0]  %s303, 256, %s305, %s292, 128, 128, 8
        $region40: #{tpu_custom_call.1} parent=35 // pred_fallthru
          _
        // Predicated region
        $region41: #{tpu_custom_call.1} parent=35 // pred_check
          %p311 = pneg %p85
        $region42: #{tpu_custom_call.1} parent=35 // pred_check_branch
          %313 = sbr.rel (%p311) target = $region44
        $region43: #{tpu_custom_call.1} parent=35 // pred_region
          %s314 = sand.u32 %s23, 1
          %s315 = scalar_lea.sflag [#allocation8], %s314
          %s316 = sand.u32 %s75, 1
          %s317 = smul.addr %s316, 24
          %s318 = scalar_lea.vmem [#allocation7], %s317
          %s320 = ssub.s32 384, 384
          %321 = vsyncadd %s315, %s320
          %s322 = smul.addr %s31, 3
          %s323 = smul.addr %s30, 3
          %s324 = sadd.s32 %s322, %s323
          %s325 = smul.addr %s324, 128
          %s326 = scalar_lea.hbm %s1, %s325
          %s327 = sshll.u32 %s318, 4
          %s328 = int_to_ptr.vmem [resolvable:$true] %s327
          %333 = dma.hbm_to_vmem [thread:$0]  %s326, 384, %s328, %s315, 128, 128, 8
        $region44: #{tpu_custom_call.1} parent=35 // pred_fallthru
          _
      $region36: #{tpu_custom_call.1} parent=5 // pred_fallthru
        _
      %p334 = scmp.le.s32.totalorder 1, %s23
      %p335 = scmp.lt.s32.totalorder %s23, 3
      %p336 = pnand %p334, %p335
      %p337 = pneg %p336
      // Predicated region
      $region45: #{tpu_custom_call.1} parent=5 // pred_check
        _
      $region46: #{tpu_custom_call.1} parent=5 // pred_check_branch
        %339 = sbr.rel (%p336) target = $region48
      $region47: #{tpu_custom_call.1} parent=5 // pred_region
        %s340 = ssub.s32 %s23, 1
        %s341 = sand.u32 %s50, 1
        %s342 = scalar_lea.sflag [#allocation5], %s341
        %s343 = sand.u32 %s50, 1
        %s344 = smul.addr %s343, 16
        %s345 = scalar_lea.vmem [#allocation4], %s344
        // Predicated region
        $region49: #{tpu_custom_call.1} parent=47 // pred_check
          %p346 = pneg %p63
        $region50: #{tpu_custom_call.1} parent=47 // pred_check_branch
          %348 = sbr.rel (%p346) target = $region52
        $region51: #{tpu_custom_call.1} parent=47 // pred_region
          %349 = dma.done %s342, 256
        $region52: #{tpu_custom_call.1} parent=47 // pred_fallthru
          _
        %s350 = sand.u32 %s28, 1
        %s351 = scalar_lea.sflag [#allocation8], %s350
        %s352 = sand.u32 %s78, 1
        %s353 = smul.addr %s352, 24
        %s354 = scalar_lea.vmem [#allocation7], %s353
        // Predicated region
        $region53: #{tpu_custom_call.1} parent=47 // pred_check
          %p355 = pneg %p91
        $region54: #{tpu_custom_call.1} parent=47 // pred_check_branch
          %357 = sbr.rel (%p355) target = $region56
        $region55: #{tpu_custom_call.1} parent=47 // pred_region
          %358 = dma.done %s351, 384
        $region56: #{tpu_custom_call.1} parent=47 // pred_fallthru
          _
        // Predicated region
        $region57: #{tpu_custom_call.1} parent=47 // pred_check
          %p359 = pneg %p112
        $region58: #{tpu_custom_call.1} parent=47 // pred_check_branch
          %361 = sbr.rel (%p359) target = $region60
        $region59: #{tpu_custom_call.1} parent=47 // pred_region
          %362 = dma.done [#allocation8], 6144
        $region60: #{tpu_custom_call.1} parent=47 // pred_fallthru
          _
        // Predicated region
        $region61: #{tpu_custom_call.1} parent=47 // pred_check
          %p363 = pneg %p133
        $region62: #{tpu_custom_call.1} parent=47 // pred_check_branch
          %365 = sbr.rel (%p363) target = $region64
        $region63: #{tpu_custom_call.1} parent=47 // pred_region
          %366 = dma.done [#allocation11], 6144
        $region64: #{tpu_custom_call.1} parent=47 // pred_fallthru
          _
        // Predicated region
        $region65: #{tpu_custom_call.1} parent=47 // pred_check
          %p367 = pneg %p154
        $region66: #{tpu_custom_call.1} parent=47 // pred_check_branch
          %369 = sbr.rel (%p367) target = $region68
        $region67: #{tpu_custom_call.1} parent=47 // pred_region
          %370 = dma.done [#allocation11], 2048
        $region68: #{tpu_custom_call.1} parent=47 // pred_fallthru
          _
        %s371 = sand.u32 %s50, 1
        %s372 = scalar_lea.sflag [#allocation5], %s371
        %s373 = sand.u32 %s50, 1
        %s374 = smul.addr %s373, 16
        %s375 = scalar_lea.vmem [#allocation4], %s374
        %p376 = pneg %p63
        %p377 = pneg %p60
        %s378 = sand.u32 %s28, 1
        %s379 = scalar_lea.sflag [#allocation8], %s378
        %s380 = sand.u32 %s78, 1
        %s381 = smul.addr %s380, 24
        %s382 = scalar_lea.vmem [#allocation7], %s381
        %p383 = pneg %p91
        %p384 = pneg %p88
        %p385 = pneg %p112
        %p386 = pneg %p109
        %p387 = pneg %p133
        %p388 = pneg %p130
        %p389 = pneg %p154
        %p390 = pneg %p151
        %p391 = pneg %p175
        %p392 = pneg %p172
        %p393 = pneg %p196
        %p394 = pneg %p193
        %p395 = pneg %p224
        %p396 = pneg %p221
        %s397 = sand.u32 %s211, 1
        %s398 = scalar_lea.sflag [#allocation6], %s397
        %s399 = sand.u32 %s211, 1
        %s400 = smul.addr %s399, 8
        %s401 = scalar_lea.vmem [#allocation13], %s400
        %s402 = smul.u32 2, %s33
        %s403 = smul.u32 %s33, 8
        %v404 = vld [vmem:[%s345] sm:$0xff]
        %v405 = vld [vmem:[%s345 + $0x8] sm:$0xff]
        %406 = vst [vmem:[#allocation2] sm:$0xff] %v404
        %407 = vst [vmem:[#allocation2 + $0x8] sm:$0xff] %v405
        %v408 = vld [vmem:[%s354] sm:$0xff]
        %v409 = vld [vmem:[%s354 + $0x8] sm:$0xff]
        %v410 = vld [vmem:[%s354 + $0x10] sm:$0xff]
        %411 = vst [vmem:[#allocation2 + $0x10] sm:$0xff] %v408
        %412 = vst [vmem:[#allocation2 + $0x18] sm:$0xff] %v409
        %413 = vst [vmem:[#allocation2 + $0x20] sm:$0xff] %v410
        %v414 = vld [vmem:[#allocation2] ss:$2 sm:$0xff]
        %s415 = scalar_lea.vmem [#allocation2], 16
        %v416 = vld [vmem:[%s415] ss:$2 sm:$0xff]
        %v417 = vld [vmem:[#allocation9] sm:$0xff]
        %v418 = vld [vmem:[#allocation9 + $0x8] sm:$0xff]
        %v419 = vld [vmem:[#allocation9 + $0x10] sm:$0xff]
        %v420 = vld [vmem:[#allocation9 + $0x18] sm:$0xff]
        %v421 = vld [vmem:[#allocation9 + $0x20] sm:$0xff]
        %v422 = vld [vmem:[#allocation9 + $0x28] sm:$0xff]
        %v423 = vld [vmem:[#allocation9 + $0x30] sm:$0xff]
        %v424 = vld [vmem:[#allocation9 + $0x38] sm:$0xff]
        %v425 = vld [vmem:[#allocation9 + $0x40] sm:$0xff]
        %v426 = vld [vmem:[#allocation9 + $0x48] sm:$0xff]
        %v427 = vld [vmem:[#allocation9 + $0x50] sm:$0xff]
        %v428 = vld [vmem:[#allocation9 + $0x58] sm:$0xff]
        %v429 = vld [vmem:[#allocation9 + $0x60] sm:$0xff]
        %v430 = vld [vmem:[#allocation9 + $0x68] sm:$0xff]
        %v431 = vld [vmem:[#allocation9 + $0x70] sm:$0xff]
        %v432 = vld [vmem:[#allocation9 + $0x78] sm:$0xff]
        %s433 = scalar_lea.vmem [#allocation2], 1
        %v434 = vld [vmem:[%s433] ss:$2 sm:$0xff]
        %s435 = scalar_lea.vmem [#allocation2], 17
        %v436 = vld [vmem:[%s435] ss:$2 sm:$0xff]
        %s437 = scalar_lea.vmem [#allocation9], 128
        %v438 = vld [vmem:[%s437] sm:$0xff]
        %v439 = vld [vmem:[%s437 + $0x8] sm:$0xff]
        %v440 = vld [vmem:[%s437 + $0x10] sm:$0xff]
        %v441 = vld [vmem:[%s437 + $0x18] sm:$0xff]
        %v442 = vld [vmem:[%s437 + $0x20] sm:$0xff]
        %v443 = vld [vmem:[%s437 + $0x28] sm:$0xff]
        %v444 = vld [vmem:[%s437 + $0x30] sm:$0xff]
        %v445 = vld [vmem:[%s437 + $0x38] sm:$0xff]
        %v446 = vld [vmem:[%s437 + $0x40] sm:$0xff]
        %v447 = vld [vmem:[%s437 + $0x48] sm:$0xff]
        %v448 = vld [vmem:[%s437 + $0x50] sm:$0xff]
        %v449 = vld [vmem:[%s437 + $0x58] sm:$0xff]
        %v450 = vld [vmem:[%s437 + $0x60] sm:$0xff]
        %v451 = vld [vmem:[%s437 + $0x68] sm:$0xff]
        %v452 = vld [vmem:[%s437 + $0x70] sm:$0xff]
        %v453 = vld [vmem:[%s437 + $0x78] sm:$0xff]
        %454 = vmatprep.subr.mxu0 0.0
        %455 = vmatpush1.msra.mxu0 %v438
        %456 = vmatprep.subr.mxu0 0.0
        %457 = vmatpush1.msra.mxu0 %v439
        %458 = vmatprep.subr.mxu0 0.0
        %459 = vmatpush1.msra.mxu0 %v440
        %460 = vmatprep.subr.mxu0 0.0
        %461 = vmatpush1.msra.mxu0 %v441
        %462 = vmatprep.subr.mxu0 0.0
        %463 = vmatpush1.msra.mxu0 %v442
        %464 = vmatprep.subr.mxu0 0.0
        %465 = vmatpush1.msra.mxu0 %v443
        %466 = vmatprep.subr.mxu0 0.0
        %467 = vmatpush1.msra.mxu0 %v444
        %468 = vmatprep.subr.mxu0 0.0
        %469 = vmatpush1.msra.mxu0 %v445
        %470 = vmatprep.subr.mxu0 0.0
        %471 = vmatpush1.msra.mxu0 %v446
        %472 = vmatprep.subr.mxu0 0.0
        %473 = vmatpush1.msra.mxu0 %v447
        %474 = vmatprep.subr.mxu0 0.0
        %475 = vmatpush1.msra.mxu0 %v448
        %476 = vmatprep.subr.mxu0 0.0
        %477 = vmatpush1.msra.mxu0 %v449
        %478 = vmatprep.subr.mxu0 0.0
        %479 = vmatpush1.msra.mxu0 %v450
        %480 = vmatprep.subr.mxu0 0.0
        %481 = vmatpush1.msra.mxu0 %v451
        %482 = vmatprep.subr.mxu0 0.0
        %483 = vmatpush1.msra.mxu0 %v452
        %484 = vmatprep.subr.mxu0 0.0
        %485 = vmatpush1.msra.mxu0 %v453
        %486 = vmatprep.subr.mxu0 0.0
        %487 = vmatpush1.msra.mxu0 0.0
        %488 = vmatprep.subr.mxu0 0.0
        %489 = vmatpush1.msra.mxu0 0.0
        %490 = vmatprep.subr.mxu0 0.0
        %491 = vmatpush1.msra.mxu0 0.0
        %492 = vmatprep.subr.mxu0 0.0
        %493 = vmatpush1.msra.mxu0 0.0
        %494 = vmatprep.subr.mxu0 0.0
        %495 = vmatpush1.msra.mxu0 0.0
        %496 = vmatprep.subr.mxu0 0.0
        %497 = vmatpush1.msra.mxu0 0.0
        %498 = vmatprep.subr.mxu0 0.0
        %499 = vmatpush1.msra.mxu0 0.0
        %500 = vmatprep.subr.mxu0 0.0
        %501 = vmatpush1.msra.mxu0 0.0
        %502 = vmatprep.subr.mxu0 0.0
        %503 = vmatpush1.msra.mxu0 0.0
        %504 = vmatprep.subr.mxu0 0.0
        %505 = vmatpush1.msra.mxu0 0.0
        %506 = vmatprep.subr.mxu0 0.0
        %507 = vmatpush1.msra.mxu0 0.0
        %508 = vmatprep.subr.mxu0 0.0
        %509 = vmatpush1.msra.mxu0 0.0
        %510 = vmatprep.subr.mxu0 0.0
        %511 = vmatpush1.msra.mxu0 0.0
        %512 = vmatprep.subr.mxu0 0.0
        %513 = vmatpush1.msra.mxu0 0.0
        %514 = vmatprep.subr.mxu0 0.0
        %515 = vmatpush1.msra.mxu0 0.0
        %516 = vmatprep.subr.mxu0 0.0
        %517 = vmatpush1.msra.mxu0 0.0
        %518 = vmatprep.mubr.f32.mxu0 0.0
        %519 = vmatmul.mubr.f32.gmra.mrb[0].mxu0 %v434
        %v520 = vpop.f32.mrb[0].mxu0
        %v521 = vadd.f32 0.0, %v520
        %v522 = vpop.f32.mrb[0].mxu0
        %523 = vmatprep.mubr.f32.mxu0 0.0
        %524 = vmatmul.mubr.f32.gmra.mrb[0].mxu0 %v436
        %v525 = vpop.f32.mrb[0].mxu0
        %v526 = vadd.f32 0.0, %v525
        %v527 = vpop.f32.mrb[0].mxu0
        %528 = vdwg.mxu0
        %529 = vmatprep.subr.mxu0 0.0
        %530 = vmatpush1.msra.mxu0 %v417
        %531 = vmatprep.subr.mxu0 0.0
        %532 = vmatpush1.msra.mxu0 %v418
        %533 = vmatprep.subr.mxu0 0.0
        %534 = vmatpush1.msra.mxu0 %v419
        %535 = vmatprep.subr.mxu0 0.0
        %536 = vmatpush1.msra.mxu0 %v420
        %537 = vmatprep.subr.mxu0 0.0
        %538 = vmatpush1.msra.mxu0 %v421
        %539 = vmatprep.subr.mxu0 0.0
        %540 = vmatpush1.msra.mxu0 %v422
        %541 = vmatprep.subr.mxu0 0.0
        %542 = vmatpush1.msra.mxu0 %v423
        %543 = vmatprep.subr.mxu0 0.0
        %544 = vmatpush1.msra.mxu0 %v424
        %545 = vmatprep.subr.mxu0 0.0
        %546 = vmatpush1.msra.mxu0 %v425
        %547 = vmatprep.subr.mxu0 0.0
        %548 = vmatpush1.msra.mxu0 %v426
        %549 = vmatprep.subr.mxu0 0.0
        %550 = vmatpush1.msra.mxu0 %v427
        %551 = vmatprep.subr.mxu0 0.0
        %552 = vmatpush1.msra.mxu0 %v428
        %553 = vmatprep.subr.mxu0 0.0
        %554 = vmatpush1.msra.mxu0 %v429
        %555 = vmatprep.subr.mxu0 0.0
        %556 = vmatpush1.msra.mxu0 %v430
        %557 = vmatprep.subr.mxu0 0.0
        %558 = vmatpush1.msra.mxu0 %v431
        %559 = vmatprep.subr.mxu0 0.0
        %560 = vmatpush1.msra.mxu0 %v432
        %561 = vmatprep.subr.mxu0 0.0
        %562 = vmatpush1.msra.mxu0 0.0
        %563 = vmatprep.subr.mxu0 0.0
        %564 = vmatpush1.msra.mxu0 0.0
        %565 = vmatprep.subr.mxu0 0.0
        %566 = vmatpush1.msra.mxu0 0.0
        %567 = vmatprep.subr.mxu0 0.0
        %568 = vmatpush1.msra.mxu0 0.0
        %569 = vmatprep.subr.mxu0 0.0
        %570 = vmatpush1.msra.mxu0 0.0
        %571 = vmatprep.subr.mxu0 0.0
        %572 = vmatpush1.msra.mxu0 0.0
        %573 = vmatprep.subr.mxu0 0.0
        %574 = vmatpush1.msra.mxu0 0.0
        %575 = vmatprep.subr.mxu0 0.0
        %576 = vmatpush1.msra.mxu0 0.0
        %577 = vmatprep.subr.mxu0 0.0
        %578 = vmatpush1.msra.mxu0 0.0
        %579 = vmatprep.subr.mxu0 0.0
        %580 = vmatpush1.msra.mxu0 0.0
        %581 = vmatprep.subr.mxu0 0.0
        %582 = vmatpush1.msra.mxu0 0.0
        %583 = vmatprep.subr.mxu0 0.0
        %584 = vmatpush1.msra.mxu0 0.0
        %585 = vmatprep.subr.mxu0 0.0
        %586 = vmatpush1.msra.mxu0 0.0
        %587 = vmatprep.subr.mxu0 0.0
        %588 = vmatpush1.msra.mxu0 0.0
        %589 = vmatprep.subr.mxu0 0.0
        %590 = vmatpush1.msra.mxu0 0.0
        %591 = vmatprep.subr.mxu0 0.0
        %592 = vmatpush1.msra.mxu0 0.0
        %593 = vmatprep.mubr.f32.mxu0 0.0
        %594 = vmatmul.mubr.f32.gmra.mrb[0].mxu0 %v414
        %v595 = vpop.f32.mrb[0].mxu0
        %v596 = vadd.f32 %v521, %v595
        %v597 = vpop.f32.mrb[0].mxu0
        %598 = vmatprep.mubr.f32.mxu0 0.0
        %599 = vmatmul.mubr.f32.gmra.mrb[0].mxu0 %v416
        %v600 = vpop.f32.mrb[0].mxu0
        %v601 = vadd.f32 %v526, %v600
        %v602 = vpop.f32.mrb[0].mxu0
        %603 = vdwg.mxu0
        %s604 = scalar_lea.vmem [#allocation2], 2
        %v605 = vld [vmem:[%s604] ss:$2 sm:$0xff]
        %s606 = scalar_lea.vmem [#allocation2], 18
        %v607 = vld [vmem:[%s606] ss:$2 sm:$0xff]
        %s608 = scalar_lea.vmem [#allocation9], 256
        %v609 = vld [vmem:[%s608] sm:$0xff]
        %v610 = vld [vmem:[%s608 + $0x8] sm:$0xff]
        %v611 = vld [vmem:[%s608 + $0x10] sm:$0xff]
        %v612 = vld [vmem:[%s608 + $0x18] sm:$0xff]
        %v613 = vld [vmem:[%s608 + $0x20] sm:$0xff]
        %v614 = vld [vmem:[%s608 + $0x28] sm:$0xff]
        %v615 = vld [vmem:[%s608 + $0x30] sm:$0xff]
        %v616 = vld [vmem:[%s608 + $0x38] sm:$0xff]
        %v617 = vld [vmem:[%s608 + $0x40] sm:$0xff]
        %v618 = vld [vmem:[%s608 + $0x48] sm:$0xff]
        %v619 = vld [vmem:[%s608 + $0x50] sm:$0xff]
        %v620 = vld [vmem:[%s608 + $0x58] sm:$0xff]
        %v621 = vld [vmem:[%s608 + $0x60] sm:$0xff]
        %v622 = vld [vmem:[%s608 + $0x68] sm:$0xff]
        %v623 = vld [vmem:[%s608 + $0x70] sm:$0xff]
        %v624 = vld [vmem:[%s608 + $0x78] sm:$0xff]
        %625 = vmatprep.subr.mxu0 0.0
        %626 = vmatpush1.msra.mxu0 %v609
        %627 = vmatprep.subr.mxu0 0.0
        %628 = vmatpush1.msra.mxu0 %v610
        %629 = vmatprep.subr.mxu0 0.0
        %630 = vmatpush1.msra.mxu0 %v611
        %631 = vmatprep.subr.mxu0 0.0
        %632 = vmatpush1.msra.mxu0 %v612
        %633 = vmatprep.subr.mxu0 0.0
        %634 = vmatpush1.msra.mxu0 %v613
        %635 = vmatprep.subr.mxu0 0.0
        %636 = vmatpush1.msra.mxu0 %v614
        %637 = vmatprep.subr.mxu0 0.0
        %638 = vmatpush1.msra.mxu0 %v615
        %639 = vmatprep.subr.mxu0 0.0
        %640 = vmatpush1.msra.mxu0 %v616
        %641 = vmatprep.subr.mxu0 0.0
        %642 = vmatpush1.msra.mxu0 %v617
        %643 = vmatprep.subr.mxu0 0.0
        %644 = vmatpush1.msra.mxu0 %v618
        %645 = vmatprep.subr.mxu0 0.0
        %646 = vmatpush1.msra.mxu0 %v619
        %647 = vmatprep.subr.mxu0 0.0
        %648 = vmatpush1.msra.mxu0 %v620
        %649 = vmatprep.subr.mxu0 0.0
        %650 = vmatpush1.msra.mxu0 %v621
        %651 = vmatprep.subr.mxu0 0.0
        %652 = vmatpush1.msra.mxu0 %v622
        %653 = vmatprep.subr.mxu0 0.0
        %654 = vmatpush1.msra.mxu0 %v623
        %655 = vmatprep.subr.mxu0 0.0
        %656 = vmatpush1.msra.mxu0 %v624
        %657 = vmatprep.subr.mxu0 0.0
        %658 = vmatpush1.msra.mxu0 0.0
        %659 = vmatprep.subr.mxu0 0.0
        %660 = vmatpush1.msra.mxu0 0.0
        %661 = vmatprep.subr.mxu0 0.0
        %662 = vmatpush1.msra.mxu0 0.0
        %663 = vmatprep.subr.mxu0 0.0
        %664 = vmatpush1.msra.mxu0 0.0
        %665 = vmatprep.subr.mxu0 0.0
        %666 = vmatpush1.msra.mxu0 0.0
        %667 = vmatprep.subr.mxu0 0.0
        %668 = vmatpush1.msra.mxu0 0.0
        %669 = vmatprep.subr.mxu0 0.0
        %670 = vmatpush1.msra.mxu0 0.0
        %671 = vmatprep.subr.mxu0 0.0
        %672 = vmatpush1.msra.mxu0 0.0
        %673 = vmatprep.subr.mxu0 0.0
        %674 = vmatpush1.msra.mxu0 0.0
        %675 = vmatprep.subr.mxu0 0.0
        %676 = vmatpush1.msra.mxu0 0.0
        %677 = vmatprep.subr.mxu0 0.0
        %678 = vmatpush1.msra.mxu0 0.0
        %679 = vmatprep.subr.mxu0 0.0
        %680 = vmatpush1.msra.mxu0 0.0
        %681 = vmatprep.subr.mxu0 0.0
        %682 = vmatpush1.msra.mxu0 0.0
        %683 = vmatprep.subr.mxu0 0.0
        %684 = vmatpush1.msra.mxu0 0.0
        %685 = vmatprep.subr.mxu0 0.0
        %686 = vmatpush1.msra.mxu0 0.0
        %687 = vmatprep.subr.mxu0 0.0
        %688 = vmatpush1.msra.mxu0 0.0
        %689 = vmatprep.mubr.f32.mxu0 0.0
        %690 = vmatmul.mubr.f32.gmra.mrb[0].mxu0 %v605
        %v691 = vpop.f32.mrb[0].mxu0
        %v692 = vadd.f32 0.0, %v691
        %v693 = vpop.f32.mrb[0].mxu0
        %694 = vmatprep.mubr.f32.mxu0 0.0
        %695 = vmatmul.mubr.f32.gmra.mrb[0].mxu0 %v607
        %v696 = vpop.f32.mrb[0].mxu0
        %v697 = vadd.f32 0.0, %v696
        %v698 = vpop.f32.mrb[0].mxu0
        %699 = vdwg.mxu0
        %v700 = vadd.f32 %v596, %v692
        %v701 = vadd.f32 %v601, %v697
        %v702 = vld [vmem:[%s5] sm:$0x1]
        %v704 = vlaneseq
        %v705 = vshrl.u32 %v704, 7
        %v706 = vsub.s32 0, %v705
        %v707 = vrot.slane %v702, %v706
        %v709 = vadd.f32 %v700, %v707
        %v710 = vadd.f32 %v701, %v707
        %v711 = vtanh.pop %v709
        %v712 = vtanh.pop %v710
        %v713 = vlaneseq
        %v714 = vshrl.u32 %v713, 7
        %v715 = vadd.s32 %v714, 8
        %s716 = ssub.s32 %s403, 1
        %v717 = vstv %s716
        %v718 = vadd.s32 %v714, %v717
        %v719 = vadd.s32 %v715, %v717
        %vm720 = vcmp.ge.s32.totalorder %v718, 0
        %vm721 = vcmp.ge.s32.totalorder %v719, 0
        %vm722 = vcmp.lt.s32.totalorder %v718, 8
        %vm723 = vcmp.lt.s32.totalorder %v719, 8
        %vm724 = vmand %vm720, %vm722
        %vm725 = vmand %vm721, %vm723
        %v726 = vsel %vm724, 1, 0
        %v727 = vsel %vm725, 1, 0
        %vm728 = vcmp.eq.s32.totalorder %v726, 1
        %vm729 = vcmp.eq.s32.totalorder %v727, 1
        %v730 = vsel %vm728, %v711, 0.0
        %v731 = vsel %vm729, %v712, 0.0
        %732 = vst [vmem:[#allocation3] sm:$0xff] %v730
        %733 = vst [vmem:[#allocation3 + $0x8] sm:$0xff] %v731
        %v734 = vld [vmem:[#allocation3] sm:$0xff]
        %v735 = vld [vmem:[#allocation10] sm:$0xff]
        %v736 = vld [vmem:[#allocation10 + $0x8] sm:$0xff]
        %v737 = vld [vmem:[#allocation10 + $0x10] sm:$0xff]
        %v738 = vld [vmem:[#allocation10 + $0x18] sm:$0xff]
        %v739 = vld [vmem:[#allocation10 + $0x20] sm:$0xff]
        %v740 = vld [vmem:[#allocation10 + $0x28] sm:$0xff]
        %v741 = vld [vmem:[#allocation10 + $0x30] sm:$0xff]
        %v742 = vld [vmem:[#allocation10 + $0x38] sm:$0xff]
        %v743 = vld [vmem:[#allocation10 + $0x40] sm:$0xff]
        %v744 = vld [vmem:[#allocation10 + $0x48] sm:$0xff]
        %v745 = vld [vmem:[#allocation10 + $0x50] sm:$0xff]
        %v746 = vld [vmem:[#allocation10 + $0x58] sm:$0xff]
        %v747 = vld [vmem:[#allocation10 + $0x60] sm:$0xff]
        %v748 = vld [vmem:[#allocation10 + $0x68] sm:$0xff]
        %v749 = vld [vmem:[#allocation10 + $0x70] sm:$0xff]
        %v750 = vld [vmem:[#allocation10 + $0x78] sm:$0xff]
        %v751 = vld [vmem:[#allocation3 + $0x1] sm:$0xff]
        %s752 = scalar_lea.vmem [#allocation10], 128
        %v753 = vld [vmem:[%s752] sm:$0xff]
        %v754 = vld [vmem:[%s752 + $0x8] sm:$0xff]
        %v755 = vld [vmem:[%s752 + $0x10] sm:$0xff]
        %v756 = vld [vmem:[%s752 + $0x18] sm:$0xff]
        %v757 = vld [vmem:[%s752 + $0x20] sm:$0xff]
        %v758 = vld [vmem:[%s752 + $0x28] sm:$0xff]
        %v759 = vld [vmem:[%s752 + $0x30] sm:$0xff]
        %v760 = vld [vmem:[%s752 + $0x38] sm:$0xff]
        %v761 = vld [vmem:[%s752 + $0x40] sm:$0xff]
        %v762 = vld [vmem:[%s752 + $0x48] sm:$0xff]
        %v763 = vld [vmem:[%s752 + $0x50] sm:$0xff]
        %v764 = vld [vmem:[%s752 + $0x58] sm:$0xff]
        %v765 = vld [vmem:[%s752 + $0x60] sm:$0xff]
        %v766 = vld [vmem:[%s752 + $0x68] sm:$0xff]
        %v767 = vld [vmem:[%s752 + $0x70] sm:$0xff]
        %v768 = vld [vmem:[%s752 + $0x78] sm:$0xff]
        %769 = vmatprep.subr.mxu0 0.0
        %770 = vmatpush1.msra.mxu0 %v753
        %771 = vmatprep.subr.mxu0 0.0
        %772 = vmatpush1.msra.mxu0 %v754
        %773 = vmatprep.subr.mxu0 0.0
        %774 = vmatpush1.msra.mxu0 %v755
        %775 = vmatprep.subr.mxu0 0.0
        %776 = vmatpush1.msra.mxu0 %v756
        %777 = vmatprep.subr.mxu0 0.0
        %778 = vmatpush1.msra.mxu0 %v757
        %779 = vmatprep.subr.mxu0 0.0
        %780 = vmatpush1.msra.mxu0 %v758
        %781 = vmatprep.subr.mxu0 0.0
        %782 = vmatpush1.msra.mxu0 %v759
        %783 = vmatprep.subr.mxu0 0.0
        %784 = vmatpush1.msra.mxu0 %v760
        %785 = vmatprep.subr.mxu0 0.0
        %786 = vmatpush1.msra.mxu0 %v761
        %787 = vmatprep.subr.mxu0 0.0
        %788 = vmatpush1.msra.mxu0 %v762
        %789 = vmatprep.subr.mxu0 0.0
        %790 = vmatpush1.msra.mxu0 %v763
        %791 = vmatprep.subr.mxu0 0.0
        %792 = vmatpush1.msra.mxu0 %v764
        %793 = vmatprep.subr.mxu0 0.0
        %794 = vmatpush1.msra.mxu0 %v765
        %795 = vmatprep.subr.mxu0 0.0
        %796 = vmatpush1.msra.mxu0 %v766
        %797 = vmatprep.subr.mxu0 0.0
        %798 = vmatpush1.msra.mxu0 %v767
        %799 = vmatprep.subr.mxu0 0.0
        %800 = vmatpush1.msra.mxu0 %v768
        %801 = vmatprep.subr.mxu0 0.0
        %802 = vmatpush1.msra.mxu0 0.0
        %803 = vmatprep.subr.mxu0 0.0
        %804 = vmatpush1.msra.mxu0 0.0
        %805 = vmatprep.subr.mxu0 0.0
        %806 = vmatpush1.msra.mxu0 0.0
        %807 = vmatprep.subr.mxu0 0.0
        %808 = vmatpush1.msra.mxu0 0.0
        %809 = vmatprep.subr.mxu0 0.0
        %810 = vmatpush1.msra.mxu0 0.0
        %811 = vmatprep.subr.mxu0 0.0
        %812 = vmatpush1.msra.mxu0 0.0
        %813 = vmatprep.subr.mxu0 0.0
        %814 = vmatpush1.msra.mxu0 0.0
        %815 = vmatprep.subr.mxu0 0.0
        %816 = vmatpush1.msra.mxu0 0.0
        %817 = vmatprep.subr.mxu0 0.0
        %818 = vmatpush1.msra.mxu0 0.0
        %819 = vmatprep.subr.mxu0 0.0
        %820 = vmatpush1.msra.mxu0 0.0
        %821 = vmatprep.subr.mxu0 0.0
        %822 = vmatpush1.msra.mxu0 0.0
        %823 = vmatprep.subr.mxu0 0.0
        %824 = vmatpush1.msra.mxu0 0.0
        %825 = vmatprep.subr.mxu0 0.0
        %826 = vmatpush1.msra.mxu0 0.0
        %827 = vmatprep.subr.mxu0 0.0
        %828 = vmatpush1.msra.mxu0 0.0
        %829 = vmatprep.subr.mxu0 0.0
        %830 = vmatpush1.msra.mxu0 0.0
        %831 = vmatprep.subr.mxu0 0.0
        %832 = vmatpush1.msra.mxu0 0.0
        %833 = vmatprep.mubr.f32.mxu0 0.0
        %834 = vmatmul.mubr.f32.gmra.mrb[0].mxu0 %v751
        %v835 = vpop.f32.mrb[0].mxu0
        %v836 = vadd.f32 0.0, %v835
        %v837 = vpop.f32.mrb[0].mxu0
        %838 = vdwg.mxu0
        %839 = vmatprep.subr.mxu0 0.0
        %840 = vmatpush1.msra.mxu0 %v735
        %841 = vmatprep.subr.mxu0 0.0
        %842 = vmatpush1.msra.mxu0 %v736
        %843 = vmatprep.subr.mxu0 0.0
        %844 = vmatpush1.msra.mxu0 %v737
        %845 = vmatprep.subr.mxu0 0.0
        %846 = vmatpush1.msra.mxu0 %v738
        %847 = vmatprep.subr.mxu0 0.0
        %848 = vmatpush1.msra.mxu0 %v739
        %849 = vmatprep.subr.mxu0 0.0
        %850 = vmatpush1.msra.mxu0 %v740
        %851 = vmatprep.subr.mxu0 0.0
        %852 = vmatpush1.msra.mxu0 %v741
        %853 = vmatprep.subr.mxu0 0.0
        %854 = vmatpush1.msra.mxu0 %v742
        %855 = vmatprep.subr.mxu0 0.0
        %856 = vmatpush1.msra.mxu0 %v743
        %857 = vmatprep.subr.mxu0 0.0
        %858 = vmatpush1.msra.mxu0 %v744
        %859 = vmatprep.subr.mxu0 0.0
        %860 = vmatpush1.msra.mxu0 %v745
        %861 = vmatprep.subr.mxu0 0.0
        %862 = vmatpush1.msra.mxu0 %v746
        %863 = vmatprep.subr.mxu0 0.0
        %864 = vmatpush1.msra.mxu0 %v747
        %865 = vmatprep.subr.mxu0 0.0
        %866 = vmatpush1.msra.mxu0 %v748
        %867 = vmatprep.subr.mxu0 0.0
        %868 = vmatpush1.msra.mxu0 %v749
        %869 = vmatprep.subr.mxu0 0.0
        %870 = vmatpush1.msra.mxu0 %v750
        %871 = vmatprep.subr.mxu0 0.0
        %872 = vmatpush1.msra.mxu0 0.0
        %873 = vmatprep.subr.mxu0 0.0
        %874 = vmatpush1.msra.mxu0 0.0
        %875 = vmatprep.subr.mxu0 0.0
        %876 = vmatpush1.msra.mxu0 0.0
        %877 = vmatprep.subr.mxu0 0.0
        %878 = vmatpush1.msra.mxu0 0.0
        %879 = vmatprep.subr.mxu0 0.0
        %880 = vmatpush1.msra.mxu0 0.0
        %881 = vmatprep.subr.mxu0 0.0
        %882 = vmatpush1.msra.mxu0 0.0
        %883 = vmatprep.subr.mxu0 0.0
        %884 = vmatpush1.msra.mxu0 0.0
        %885 = vmatprep.subr.mxu0 0.0
        %886 = vmatpush1.msra.mxu0 0.0
        %887 = vmatprep.subr.mxu0 0.0
        %888 = vmatpush1.msra.mxu0 0.0
        %889 = vmatprep.subr.mxu0 0.0
        %890 = vmatpush1.msra.mxu0 0.0
        %891 = vmatprep.subr.mxu0 0.0
        %892 = vmatpush1.msra.mxu0 0.0
        %893 = vmatprep.subr.mxu0 0.0
        %894 = vmatpush1.msra.mxu0 0.0
        %895 = vmatprep.subr.mxu0 0.0
        %896 = vmatpush1.msra.mxu0 0.0
        %897 = vmatprep.subr.mxu0 0.0
        %898 = vmatpush1.msra.mxu0 0.0
        %899 = vmatprep.subr.mxu0 0.0
        %900 = vmatpush1.msra.mxu0 0.0
        %901 = vmatprep.subr.mxu0 0.0
        %902 = vmatpush1.msra.mxu0 0.0
        %903 = vmatprep.mubr.f32.mxu0 0.0
        %904 = vmatmul.mubr.f32.gmra.mrb[0].mxu0 %v734
        %v905 = vpop.f32.mrb[0].mxu0
        %v906 = vadd.f32 %v836, %v905
        %v907 = vpop.f32.mrb[0].mxu0
        %908 = vdwg.mxu0
        %v909 = vld [vmem:[#allocation3 + $0x2] sm:$0xff]
        %s910 = scalar_lea.vmem [#allocation10], 256
        %v911 = vld [vmem:[%s910] sm:$0xff]
        %v912 = vld [vmem:[%s910 + $0x8] sm:$0xff]
        %v913 = vld [vmem:[%s910 + $0x10] sm:$0xff]
        %v914 = vld [vmem:[%s910 + $0x18] sm:$0xff]
        %v915 = vld [vmem:[%s910 + $0x20] sm:$0xff]
        %v916 = vld [vmem:[%s910 + $0x28] sm:$0xff]
        %v917 = vld [vmem:[%s910 + $0x30] sm:$0xff]
        %v918 = vld [vmem:[%s910 + $0x38] sm:$0xff]
        %v919 = vld [vmem:[%s910 + $0x40] sm:$0xff]
        %v920 = vld [vmem:[%s910 + $0x48] sm:$0xff]
        %v921 = vld [vmem:[%s910 + $0x50] sm:$0xff]
        %v922 = vld [vmem:[%s910 + $0x58] sm:$0xff]
        %v923 = vld [vmem:[%s910 + $0x60] sm:$0xff]
        %v924 = vld [vmem:[%s910 + $0x68] sm:$0xff]
        %v925 = vld [vmem:[%s910 + $0x70] sm:$0xff]
        %v926 = vld [vmem:[%s910 + $0x78] sm:$0xff]
        %927 = vmatprep.subr.mxu0 0.0
        %928 = vmatpush1.msra.mxu0 %v911
        %929 = vmatprep.subr.mxu0 0.0
        %930 = vmatpush1.msra.mxu0 %v912
        %931 = vmatprep.subr.mxu0 0.0
        %932 = vmatpush1.msra.mxu0 %v913
        %933 = vmatprep.subr.mxu0 0.0
        %934 = vmatpush1.msra.mxu0 %v914
        %935 = vmatprep.subr.mxu0 0.0
        %936 = vmatpush1.msra.mxu0 %v915
        %937 = vmatprep.subr.mxu0 0.0
        %938 = vmatpush1.msra.mxu0 %v916
        %939 = vmatprep.subr.mxu0 0.0
        %940 = vmatpush1.msra.mxu0 %v917
        %941 = vmatprep.subr.mxu0 0.0
        %942 = vmatpush1.msra.mxu0 %v918
        %943 = vmatprep.subr.mxu0 0.0
        %944 = vmatpush1.msra.mxu0 %v919
        %945 = vmatprep.subr.mxu0 0.0
        %946 = vmatpush1.msra.mxu0 %v920
        %947 = vmatprep.subr.mxu0 0.0
        %948 = vmatpush1.msra.mxu0 %v921
        %949 = vmatprep.subr.mxu0 0.0
        %950 = vmatpush1.msra.mxu0 %v922
        %951 = vmatprep.subr.mxu0 0.0
        %952 = vmatpush1.msra.mxu0 %v923
        %953 = vmatprep.subr.mxu0 0.0
        %954 = vmatpush1.msra.mxu0 %v924
        %955 = vmatprep.subr.mxu0 0.0
        %956 = vmatpush1.msra.mxu0 %v925
        %957 = vmatprep.subr.mxu0 0.0
        %958 = vmatpush1.msra.mxu0 %v926
        %959 = vmatprep.subr.mxu0 0.0
        %960 = vmatpush1.msra.mxu0 0.0
        %961 = vmatprep.subr.mxu0 0.0
        %962 = vmatpush1.msra.mxu0 0.0
        %963 = vmatprep.subr.mxu0 0.0
        %964 = vmatpush1.msra.mxu0 0.0
        %965 = vmatprep.subr.mxu0 0.0
        %966 = vmatpush1.msra.mxu0 0.0
        %967 = vmatprep.subr.mxu0 0.0
        %968 = vmatpush1.msra.mxu0 0.0
        %969 = vmatprep.subr.mxu0 0.0
        %970 = vmatpush1.msra.mxu0 0.0
        %971 = vmatprep.subr.mxu0 0.0
        %972 = vmatpush1.msra.mxu0 0.0
        %973 = vmatprep.subr.mxu0 0.0
        %974 = vmatpush1.msra.mxu0 0.0
        %975 = vmatprep.subr.mxu0 0.0
        %976 = vmatpush1.msra.mxu0 0.0
        %977 = vmatprep.subr.mxu0 0.0
        %978 = vmatpush1.msra.mxu0 0.0
        %979 = vmatprep.subr.mxu0 0.0
        %980 = vmatpush1.msra.mxu0 0.0
        %981 = vmatprep.subr.mxu0 0.0
        %982 = vmatpush1.msra.mxu0 0.0
        %983 = vmatprep.subr.mxu0 0.0
        %984 = vmatpush1.msra.mxu0 0.0
        %985 = vmatprep.subr.mxu0 0.0
        %986 = vmatpush1.msra.mxu0 0.0
        %987 = vmatprep.subr.mxu0 0.0
        %988 = vmatpush1.msra.mxu0 0.0
        %989 = vmatprep.subr.mxu0 0.0
        %990 = vmatpush1.msra.mxu0 0.0
        %991 = vmatprep.mubr.f32.mxu0 0.0
        %992 = vmatmul.mubr.f32.gmra.mrb[0].mxu0 %v909
        %v993 = vpop.f32.mrb[0].mxu0
        %v994 = vadd.f32 0.0, %v993
        %v995 = vpop.f32.mrb[0].mxu0
        %996 = vdwg.mxu0
        %v997 = vadd.f32 %v906, %v994
        %s998 = scalar_lea.vmem [#allocation2], 3
        %v999 = vld [vmem:[%s998] ss:$2 sm:$0xff]
        %v1000 = vld [vmem:[#allocation12] sm:$0xff]
        %v1001 = vld [vmem:[#allocation12 + $0x8] sm:$0xff]
        %v1002 = vld [vmem:[#allocation12 + $0x10] sm:$0xff]
        %v1003 = vld [vmem:[#allocation12 + $0x18] sm:$0xff]
        %v1004 = vld [vmem:[#allocation12 + $0x20] sm:$0xff]
        %v1005 = vld [vmem:[#allocation12 + $0x28] sm:$0xff]
        %v1006 = vld [vmem:[#allocation12 + $0x30] sm:$0xff]
        %v1007 = vld [vmem:[#allocation12 + $0x38] sm:$0xff]
        %v1008 = vld [vmem:[#allocation12 + $0x40] sm:$0xff]
        %v1009 = vld [vmem:[#allocation12 + $0x48] sm:$0xff]
        %v1010 = vld [vmem:[#allocation12 + $0x50] sm:$0xff]
        %v1011 = vld [vmem:[#allocation12 + $0x58] sm:$0xff]
        %v1012 = vld [vmem:[#allocation12 + $0x60] sm:$0xff]
        %v1013 = vld [vmem:[#allocation12 + $0x68] sm:$0xff]
        %v1014 = vld [vmem:[#allocation12 + $0x70] sm:$0xff]
        %v1015 = vld [vmem:[#allocation12 + $0x78] sm:$0xff]
        %1016 = vmatprep.subr.mxu0 0.0
        %1017 = vmatpush1.msra.mxu0 %v1000
        %1018 = vmatprep.subr.mxu0 0.0
        %1019 = vmatpush1.msra.mxu0 %v1001
        %1020 = vmatprep.subr.mxu0 0.0
        %1021 = vmatpush1.msra.mxu0 %v1002
        %1022 = vmatprep.subr.mxu0 0.0
        %1023 = vmatpush1.msra.mxu0 %v1003
        %1024 = vmatprep.subr.mxu0 0.0
        %1025 = vmatpush1.msra.mxu0 %v1004
        %1026 = vmatprep.subr.mxu0 0.0
        %1027 = vmatpush1.msra.mxu0 %v1005
        %1028 = vmatprep.subr.mxu0 0.0
        %1029 = vmatpush1.msra.mxu0 %v1006
        %1030 = vmatprep.subr.mxu0 0.0
        %1031 = vmatpush1.msra.mxu0 %v1007
        %1032 = vmatprep.subr.mxu0 0.0
        %1033 = vmatpush1.msra.mxu0 %v1008
        %1034 = vmatprep.subr.mxu0 0.0
        %1035 = vmatpush1.msra.mxu0 %v1009
        %1036 = vmatprep.subr.mxu0 0.0
        %1037 = vmatpush1.msra.mxu0 %v1010
        %1038 = vmatprep.subr.mxu0 0.0
        %1039 = vmatpush1.msra.mxu0 %v1011
        %1040 = vmatprep.subr.mxu0 0.0
        %1041 = vmatpush1.msra.mxu0 %v1012
        %1042 = vmatprep.subr.mxu0 0.0
        %1043 = vmatpush1.msra.mxu0 %v1013
        %1044 = vmatprep.subr.mxu0 0.0
        %1045 = vmatpush1.msra.mxu0 %v1014
        %1046 = vmatprep.subr.mxu0 0.0
        %1047 = vmatpush1.msra.mxu0 %v1015
        %1048 = vmatprep.subr.mxu0 0.0
        %1049 = vmatpush1.msra.mxu0 0.0
        %1050 = vmatprep.subr.mxu0 0.0
        %1051 = vmatpush1.msra.mxu0 0.0
        %1052 = vmatprep.subr.mxu0 0.0
        %1053 = vmatpush1.msra.mxu0 0.0
        %1054 = vmatprep.subr.mxu0 0.0
        %1055 = vmatpush1.msra.mxu0 0.0
        %1056 = vmatprep.subr.mxu0 0.0
        %1057 = vmatpush1.msra.mxu0 0.0
        %1058 = vmatprep.subr.mxu0 0.0
        %1059 = vmatpush1.msra.mxu0 0.0
        %1060 = vmatprep.subr.mxu0 0.0
        %1061 = vmatpush1.msra.mxu0 0.0
        %1062 = vmatprep.subr.mxu0 0.0
        %1063 = vmatpush1.msra.mxu0 0.0
        %1064 = vmatprep.subr.mxu0 0.0
        %1065 = vmatpush1.msra.mxu0 0.0
        %1066 = vmatprep.subr.mxu0 0.0
        %1067 = vmatpush1.msra.mxu0 0.0
        %1068 = vmatprep.subr.mxu0 0.0
        %1069 = vmatpush1.msra.mxu0 0.0
        %1070 = vmatprep.subr.mxu0 0.0
        %1071 = vmatpush1.msra.mxu0 0.0
        %1072 = vmatprep.subr.mxu0 0.0
        %1073 = vmatpush1.msra.mxu0 0.0
        %1074 = vmatprep.subr.mxu0 0.0
        %1075 = vmatpush1.msra.mxu0 0.0
        %1076 = vmatprep.subr.mxu0 0.0
        %1077 = vmatpush1.msra.mxu0 0.0
        %1078 = vmatprep.subr.mxu0 0.0
        %1079 = vmatpush1.msra.mxu0 0.0
        %1080 = vmatprep.mubr.f32.mxu0 0.0
        %1081 = vmatmul.mubr.f32.gmra.mrb[0].mxu0 %v999
        %v1082 = vpop.f32.mrb[0].mxu0
        %v1083 = vadd.f32 0.0, %v1082
        %v1084 = vpop.f32.mrb[0].mxu0
        %1085 = vdwg.mxu0
        %v1086 = vadd.f32 %v997, %v1083
        %v1087 = vld [vmem:[%s6] sm:$0x1]
        %v1089 = vlaneseq
        %v1090 = vshrl.u32 %v1089, 7
        %v1091 = vsub.s32 0, %v1090
        %v1092 = vrot.slane %v1087, %v1091
        %v1094 = vadd.f32 %v1086, %v1092
        %v1095 = vtanh.pop %v1094
        %1096 = vst [vmem:[%s401] sm:$0xff] %v1095
        %s1097 = sand.u32 %s211, 1
        %s1098 = scalar_lea.sflag [#allocation6], %s1097
        %s1099 = sand.u32 %s211, 1
        %s1100 = smul.addr %s1099, 8
        %s1101 = scalar_lea.vmem [#allocation13], %s1100
        // Predicated region
        $region69: #{tpu_custom_call.1} parent=47 // pred_check
          %p1102 = pneg %p221
        $region70: #{tpu_custom_call.1} parent=47 // pred_check_branch
          %1104 = sbr.rel (%p1102) target = $region72
        $region71: #{tpu_custom_call.1} parent=47 // pred_region
          %s1106 = ssub.s32 128, 128
          %1107 = vsyncadd %s1098, %s1106
          %s1108 = sadd.s32 %s33, %s32
          %s1109 = smul.addr %s1108, 128
          %s1110 = scalar_lea.hbm %s7, %s1109
          %s1112 = sshll.u32 %s1101, 4
          %s1113 = int_to_ptr.vmem [resolvable:$true] %s1112
          %1115 = dma.vmem_to_hbm [thread:$0]  %s1113, 128, %s1110, %s1098
        $region72: #{tpu_custom_call.1} parent=47 // pred_fallthru
          _
      $region48: #{tpu_custom_call.1} parent=5 // pred_fallthru
        _
      %p1116 = scmp.le.s32.totalorder 2, %s23
      // Predicated region
      $region73: #{tpu_custom_call.1} parent=5 // pred_check
        %p1117 = pneg %p1116
      $region74: #{tpu_custom_call.1} parent=5 // pred_check_branch
        %1119 = sbr.rel (%p1117) target = $region76
      $region75: #{tpu_custom_call.1} parent=5 // pred_region
        %s1120 = ssub.s32 %s23, 2
        // Predicated region
        $region77: #{tpu_custom_call.1} parent=75 // pred_check
          %p1121 = pneg %p227
        $region78: #{tpu_custom_call.1} parent=75 // pred_check_branch
          %1123 = sbr.rel (%p1121) target = $region80
        $region79: #{tpu_custom_call.1} parent=75 // pred_region
          %s1124 = sand.u32 %s212, 1
          %s1125 = scalar_lea.sflag [#allocation6], %s1124
          %s1126 = sand.u32 %s212, 1
          %s1127 = smul.addr %s1126, 8
          %s1128 = scalar_lea.vmem [#allocation13], %s1127
          %1129 = dma.done %s1125, 128
        $region80: #{tpu_custom_call.1} parent=75 // pred_fallthru
          _
      $region76: #{tpu_custom_call.1} parent=5 // pred_fallthru
        _
    $region6: #{tpu_custom_call.1} parent=1 // loop_footer
      %s27 = sadd.s32 1, %s23
    $region7: #{tpu_custom_call.1} parent=1 // loop_footer_branch
      %22 = sbr.rel target = $region3
    $region8: #{tpu_custom_call.1} parent=1 // loop_exit
      _
    %1130 = vsyncpa [#allocation5], 1
    %s1131 = scalar_lea.sflag [#allocation5], 1
    %1132 = vsyncpa %s1131, 1
    %1133 = vsyncpa [#allocation8], 1
    %s1134 = scalar_lea.sflag [#allocation8], 1
    %1135 = vsyncpa %s1134, 1
    %1136 = vsyncpa [#allocation11], 1
    %1137 = vsyncpa [#allocation6], 1
    %s1138 = scalar_lea.sflag [#allocation6], 1
    %1139 = vsyncpa %s1138, 1

</llo_original>
